<compile_context>
chip_gen: v7x
topology: tpu7x:2x2x1
jax: 0.10.0
libtpu: 0.0.40
codegen_flags: <defaults>
</compile_context>

<pallas_src>
import jax
import jax.numpy as jnp
from jax.experimental import pallas as pl
from jax.experimental.pallas import tpu as pltpu

EMBED_DIM = 768
HIDDEN = 512
NUM_CLASSES = 6
OUT_PAD = 128          # lane-dense padded logits width
MAX_BLOCK_B = 512      # batch-tile cap (VMEM-safe on v5e/v6e/v7x)


def _classifier_kernel(t_ref, a_ref, w1t_ref, w1a_ref, b1_ref, w2_ref, b2_ref,
                       o_ref):
    # First linear on the concatenated embedding, done as two MXU matmuls:
    #   [text | audio] @ [[W1_text], [W1_audio]] = text@W1_text + audio@W1_audio
    # bf16 operands, fp32 accumulation.
    h = jnp.dot(t_ref[...], w1t_ref[...], preferred_element_type=jnp.float32)
    h = h + jnp.dot(a_ref[...], w1a_ref[...],
                    preferred_element_type=jnp.float32)
    h = jnp.maximum(h + b1_ref[...], 0.0)          # fp32 bias + ReLU
    # TODO(synk): nn.Dropout(0.3) is identity in eval mode; training-mode
    # stochastic masking would use pltpu.prng_seed / pltpu.prng_random_bits.
    out = jnp.dot(h.astype(w2_ref.dtype), w2_ref[...],
                  preferred_element_type=jnp.float32)
    o_ref[...] = (out + b2_ref[...]).astype(o_ref.dtype)   # bf16 slab


def _round_up(x, m):
    return pl.cdiv(x, m) * m


def _choose_block_b(batch):
    """Batch-tile size: large tiles for HBM efficiency, >=2 blocks for v7x."""
    if batch < 256:
        return batch                   # single full-array block (always legal)
    # At least two grid blocks (feeds both v7x TensorCores); tiles capped at
    # 512 rows so double-buffered VMEM stays under v5e's 16 MiB default.
    return min(MAX_BLOCK_B, _round_up(pl.cdiv(batch, 2), 16))


def emotion_classifier_forward(text_embeds, audio_embeds, prepared_params,
                               *, block_b=None):
    """Fused classifier head: concat -> Linear -> ReLU -> (Dropout) -> Linear.

    text_embeds / audio_embeds: [B, 768]; bf16 preferred (fp32 is cast once).
    prepared_params: output of prepare_params() (bf16 weights, padded W2/b2).
    Returns fp32 logits [B, NUM_CLASSES].
    """
    B = text_embeds.shape[0]
    if block_b is None:
        block_b = _choose_block_b(B)
    n_blocks = pl.cdiv(B, block_b)

    # No-ops when the upstream encoders already emit bf16 (preferred path).
    t = text_embeds.astype(jnp.bfloat16)
    a = audio_embeds.astype(jnp.bfloat16)

    w1t = prepared_params["w1_text"]
    w1a = prepared_params["w1_audio"]
    b1 = prepared_params["b1"]
    w2p = prepared_params["w2_padded"]
    b2p = prepared_params["b2_padded"]

    const = lambda shape: pl.BlockSpec(shape, lambda i: (0, 0))
    batched = lambda shape: pl.BlockSpec(shape, lambda i: (i, 0))

    flops = 2 * B * (2 * EMBED_DIM) * HIDDEN + 2 * B * HIDDEN * OUT_PAD
    bytes_accessed = (
        2 * B * EMBED_DIM * 2                              # bf16 embeddings
        + (2 * EMBED_DIM * HIDDEN + HIDDEN * OUT_PAD) * 2  # bf16 weights
        + (HIDDEN + OUT_PAD) * 4                           # fp32 biases
        + B * OUT_PAD * 2)                                 # bf16 output slab

    out_padded = pl.pallas_call(
        _classifier_kernel,
        out_shape=jax.ShapeDtypeStruct((B, OUT_PAD), jnp.bfloat16),
        grid=(n_blocks,),
        in_specs=[
            batched((block_b, EMBED_DIM)),   # text embeddings tile
            batched((block_b, EMBED_DIM)),   # audio embeddings tile
            const((EMBED_DIM, HIDDEN)),      # W1 (text half), [in, out]
            const((EMBED_DIM, HIDDEN)),      # W1 (audio half), [in, out]
            const((1, HIDDEN)),              # b1 (fp32)
            const((HIDDEN, OUT_PAD)),        # W2 padded, [in, out_pad]
            const((1, OUT_PAD)),             # b2 padded (fp32)
        ],
        out_specs=batched((block_b, OUT_PAD)),
        compiler_params=pltpu.CompilerParams(
            dimension_semantics=("parallel",)),
        cost_estimate=pl.CostEstimate(flops=flops, transcendentals=0,
                                      bytes_accessed=bytes_accessed),
    )(t, a, w1t, w1a, b1, w2p, b2p)

    # Drop padded logit columns; upcast the bf16 slab to fp32 logits.
    return out_padded[:, :NUM_CLASSES].astype(jnp.float32)


def init_params(key):
    """Deterministic synthetic init matching nn.Linear shapes (fp32 canonical).

    PyTorch: Linear(1536, 512).weight is [512, 1536]; stored transposed as
    [1536, 512] so the kernel computes x @ W.
    """
    k1, k2, k3, k4 = jax.random.split(key, 4)
    in1 = 2 * EMBED_DIM
    s1 = 1.0 / jnp.sqrt(jnp.float32(in1))
    s2 = 1.0 / jnp.sqrt(jnp.float32(HIDDEN))
    return {
        "w1": jax.random.uniform(k1, (in1, HIDDEN), jnp.float32, -s1, s1),
        "b1": jax.random.uniform(k2, (1, HIDDEN), jnp.float32, -s1, s1),
        "w2": jax.random.uniform(k3, (HIDDEN, NUM_CLASSES), jnp.float32,
                                 -s2, s2),
        "b2": jax.random.uniform(k4, (1, NUM_CLASSES), jnp.float32, -s2, s2),
    }


def prepare_params(params):
    """One-time kernel-side packing: bf16 weight cast, W1 split along the
    input axis, W2/b2 zero-padded to the lane-dense 128-wide logits slab.
    Call once and reuse across forwards (no per-call cast/pad passes)."""
    w1 = params["w1"].astype(jnp.bfloat16)
    return {
        "w1_text": w1[:EMBED_DIM],
        "w1_audio": w1[EMBED_DIM:],
        "b1": params["b1"].astype(jnp.float32),
        "w2_padded": jnp.pad(params["w2"].astype(jnp.bfloat16),
                             ((0, 0), (0, OUT_PAD - NUM_CLASSES))),
        "b2_padded": jnp.pad(params["b2"].astype(jnp.float32),
                             ((0, 0), (0, OUT_PAD - NUM_CLASSES))),
    }


def reference_forward_bf16(text_embeds, audio_embeds, params):
    """Pure-JAX reference mirroring the kernel's bf16-operand / fp32-accum math
    and bf16 output rounding (eval-mode dropout = identity)."""
    combined = jnp.concatenate([text_embeds, audio_embeds],
                               axis=1).astype(jnp.bfloat16)
    w1 = params["w1"].astype(jnp.bfloat16)
    h = jnp.dot(combined, w1, preferred_element_type=jnp.float32)
    h = jnp.maximum(h + params["b1"], 0.0)
    out = jnp.dot(h.astype(jnp.bfloat16), params["w2"].astype(jnp.bfloat16),
                  preferred_element_type=jnp.float32)
    out = out + params["b2"]
    return out.astype(jnp.bfloat16).astype(jnp.float32)


def reference_forward_fp32(text_embeds, audio_embeds, params):
    """Full-precision reference (matches the original PyTorch eval forward)."""
    combined = jnp.concatenate([text_embeds.astype(jnp.float32),
                                audio_embeds.astype(jnp.float32)], axis=1)
    h = jnp.maximum(combined @ params["w1"] + params["b1"], 0.0)
    return h @ params["w2"] + params["b2"]


if __name__ == "__main__":
    key = jax.random.PRNGKey(0)
    kp, kdata = jax.random.split(key)

    params = init_params(kp)
    prepared = prepare_params(params)

    def run_case(batch, case_key, block_b=None):
        kt, ka = jax.random.split(case_key)
        # Synthetic encoder outputs (stand-ins for BERT [CLS] / HuBERT
        # mean-pool), emitted directly in bf16 as the kernel prefers.
        t = jax.random.normal(kt, (batch, EMBED_DIM),
                              jnp.float32).astype(jnp.bfloat16)
        a = jax.random.normal(ka, (batch, EMBED_DIM),
                              jnp.float32).astype(jnp.bfloat16)

        logits = emotion_classifier_forward(t, a, prepared, block_b=block_b)
        logits = jax.block_until_ready(logits)
        assert logits.shape == (batch, NUM_CLASSES)
        assert logits.dtype == jnp.float32

        ref_bf = reference_forward_bf16(t, a, params)
        ref_fp = reference_forward_fp32(t, a, params)
        # Tight check vs a bf16-matched reference, looser vs full fp32.
        assert jnp.allclose(logits, ref_bf, atol=2e-2, rtol=2e-2), (
            float(jnp.max(jnp.abs(logits - ref_bf))))
        assert jnp.allclose(logits, ref_fp, atol=6e-2, rtol=6e-2), (
            float(jnp.max(jnp.abs(logits - ref_fp))))

    k1, k2 = jax.random.split(kdata)
    # Small batch: single full-array block.
    run_case(2, k1)
    # Ragged multi-block path: 2 grid blocks with a partial (masked) last tile.
    run_case(20, k2, block_b=16)

    print("KERNEL_OK")
</pallas_src>

<mosaic_0001>
module attributes {stable_mosaic.version = 11 : i64} {
  func.func @_classifier_kernel(%arg0: i32, %arg1: memref<2x768xbf16, #tpu.memory_space<vmem>>, %arg2: memref<2x768xbf16, #tpu.memory_space<vmem>>, %arg3: memref<768x512xbf16, #tpu.memory_space<vmem>>, %arg4: memref<768x512xbf16, #tpu.memory_space<vmem>>, %arg5: memref<1x512xf32, #tpu.memory_space<vmem>>, %arg6: memref<512x128xbf16, #tpu.memory_space<vmem>>, %arg7: memref<1x128xf32, #tpu.memory_space<vmem>>, %arg8: memref<2x128xbf16, #tpu.memory_space<vmem>>) attributes {dimension_semantics = [#tpu.dimension_semantics<parallel>], iteration_bounds = array<i64: 1>, scalar_prefetch = 0 : i64, scratch_operands = 0 : i64, tpu.core_type = #tpu.core_type<tc>, window_params = [{transform_indices = @transform_0, window_bounds = array<i64: 2, 768>}, {transform_indices = @transform_1, window_bounds = array<i64: 2, 768>}, {pipeline_mode = #tpu.pipeline_mode<synchronous>, transform_indices = @transform_2, window_bounds = array<i64: 768, 512>}, {pipeline_mode = #tpu.pipeline_mode<synchronous>, transform_indices = @transform_3, window_bounds = array<i64: 768, 512>}, {pipeline_mode = #tpu.pipeline_mode<synchronous>, transform_indices = @transform_4, window_bounds = array<i64: 1, 512>}, {pipeline_mode = #tpu.pipeline_mode<synchronous>, transform_indices = @transform_5, window_bounds = array<i64: 512, 128>}, {pipeline_mode = #tpu.pipeline_mode<synchronous>, transform_indices = @transform_6, window_bounds = array<i64: 1, 128>}, {transform_indices = @transform_7, window_bounds = array<i64: 2, 128>}]} {
    %c0 = arith.constant 0 : index
    %c0_0 = arith.constant 0 : index
    %0 = vector.load %arg1[%c0, %c0_0] : memref<2x768xbf16, #tpu.memory_space<vmem>>, vector<2x768xbf16>
    %c0_1 = arith.constant 0 : index
    %c0_2 = arith.constant 0 : index
    %1 = vector.load %arg3[%c0_1, %c0_2] : memref<768x512xbf16, #tpu.memory_space<vmem>>, vector<768x512xbf16>
    %cst = arith.constant dense<0.000000e+00> : vector<2x512xf32>
    %2 = tpu.matmul %0, %1, %cst {dimension_numbers = #tpu.dot_dimension_numbers<[1], [0], [0], [1], [0, 0, 1, 1], [], []>} : vector<2x768xbf16>, vector<768x512xbf16>, vector<2x512xf32> -> vector<2x512xf32>
    %c0_3 = arith.constant 0 : index
    %c0_4 = arith.constant 0 : index
    %3 = vector.load %arg2[%c0_3, %c0_4] : memref<2x768xbf16, #tpu.memory_space<vmem>>, vector<2x768xbf16>
    %c0_5 = arith.constant 0 : index
    %c0_6 = arith.constant 0 : index
    %4 = vector.load %arg4[%c0_5, %c0_6] : memref<768x512xbf16, #tpu.memory_space<vmem>>, vector<768x512xbf16>
    %cst_7 = arith.constant dense<0.000000e+00> : vector<2x512xf32>
    %5 = tpu.matmul %3, %4, %cst_7 {dimension_numbers = #tpu.dot_dimension_numbers<[1], [0], [0], [1], [0, 0, 1, 1], [], []>} : vector<2x768xbf16>, vector<768x512xbf16>, vector<2x512xf32> -> vector<2x512xf32>
    %6 = arith.addf %2, %5 : vector<2x512xf32>
    %c0_8 = arith.constant 0 : index
    %c0_9 = arith.constant 0 : index
    %7 = vector.load %arg5[%c0_8, %c0_9] : memref<1x512xf32, #tpu.memory_space<vmem>>, vector<1x512xf32>
    %8 = vector.broadcast %7 : vector<1x512xf32> to vector<2x512xf32>
    %9 = arith.addf %6, %8 : vector<2x512xf32>
    %cst_10 = arith.constant 0.000000e+00 : f32
    %10 = vector.broadcast %cst_10 : f32 to vector<2x512xf32>
    %11 = arith.maximumf %9, %10 : vector<2x512xf32>
    %12 = arith.truncf %11 : vector<2x512xf32> to vector<2x512xbf16>
    %c0_11 = arith.constant 0 : index
    %c0_12 = arith.constant 0 : index
    %13 = vector.load %arg6[%c0_11, %c0_12] : memref<512x128xbf16, #tpu.memory_space<vmem>>, vector<512x128xbf16>
    %cst_13 = arith.constant dense<0.000000e+00> : vector<2x128xf32>
    %14 = tpu.matmul %12, %13, %cst_13 {dimension_numbers = #tpu.dot_dimension_numbers<[1], [0], [0], [1], [0, 0, 1, 1], [], []>} : vector<2x512xbf16>, vector<512x128xbf16>, vector<2x128xf32> -> vector<2x128xf32>
    %c0_14 = arith.constant 0 : index
    %c0_15 = arith.constant 0 : index
    %15 = vector.load %arg7[%c0_14, %c0_15] : memref<1x128xf32, #tpu.memory_space<vmem>>, vector<1x128xf32>
    %16 = vector.broadcast %15 : vector<1x128xf32> to vector<2x128xf32>
    %17 = arith.addf %14, %16 : vector<2x128xf32>
    %18 = arith.truncf %17 : vector<2x128xf32> to vector<2x128xbf16>
    %c0_16 = arith.constant 0 : index
    %c0_17 = arith.constant 0 : index
    %19 = vector.load %arg8[%c0_16, %c0_17] : memref<2x128xbf16, #tpu.memory_space<vmem>>, vector<2x128xbf16>
    tpu.vector_store %arg8[%c0_16, %c0_17], %18 {strides = array<i32>} : memref<2x128xbf16, #tpu.memory_space<vmem>>, vector<2x128xbf16>,
    return
  }
  func.func @transform_0(%arg0: i32) -> (i32, i32) {
    %c0_i32 = arith.constant 0 : i32
    %c0_i32_0 = arith.constant 0 : i32
    return %arg0, %c0_i32 : i32, i32
  }
  func.func @transform_1(%arg0: i32) -> (i32, i32) {
    %c0_i32 = arith.constant 0 : i32
    %c0_i32_0 = arith.constant 0 : i32
    return %arg0, %c0_i32 : i32, i32
  }
  func.func @transform_2(%arg0: i32) -> (i32, i32) {
    %c0_i32 = arith.constant 0 : i32
    %c0_i32_0 = arith.constant 0 : i32
    %c0_i32_1 = arith.constant 0 : i32
    return %c0_i32, %c0_i32_0 : i32, i32
  }
  func.func @transform_3(%arg0: i32) -> (i32, i32) {
    %c0_i32 = arith.constant 0 : i32
    %c0_i32_0 = arith.constant 0 : i32
    %c0_i32_1 = arith.constant 0 : i32
    return %c0_i32, %c0_i32_0 : i32, i32
  }
  func.func @transform_4(%arg0: i32) -> (i32, i32) {
    %c0_i32 = arith.constant 0 : i32
    %c0_i32_0 = arith.constant 0 : i32
    %c0_i32_1 = arith.constant 0 : i32
    return %c0_i32, %c0_i32_0 : i32, i32
  }
  func.func @transform_5(%arg0: i32) -> (i32, i32) {
    %c0_i32 = arith.constant 0 : i32
    %c0_i32_0 = arith.constant 0 : i32
    %c0_i32_1 = arith.constant 0 : i32
    return %c0_i32, %c0_i32_0 : i32, i32
  }
  func.func @transform_6(%arg0: i32) -> (i32, i32) {
    %c0_i32 = arith.constant 0 : i32
    %c0_i32_0 = arith.constant 0 : i32
    %c0_i32_1 = arith.constant 0 : i32
    return %c0_i32, %c0_i32_0 : i32, i32
  }
  func.func @transform_7(%arg0: i32) -> (i32, i32) {
    %c0_i32 = arith.constant 0 : i32
    %c0_i32_0 = arith.constant 0 : i32
    return %arg0, %c0_i32 : i32, i32
  }
}

</mosaic_0001>

<llo_original>
// kernel: tpu_custom_call.1
$region0: #{tpu_custom_call.1}
  #allocation0 [shape = 'u32[]', space=smem, size = 0x4, offset = 0x4, fixed_abs, tag = 'smem constant byte address 0x4 - core index']
  #allocation1 [shape = 'u32[144,128]{1,0:T(1,128)}', space=vmem, size = 0x12000, scoped, tag = 'internal scratch']
  %s0 = inlined_call_operand.hbm [shape: bf16[2,768], index: 0, kind: input, shape index: {}]
  %s1 = inlined_call_operand.hbm [shape: bf16[2,768], index: 1, kind: input, shape index: {}]
  %s2 = inlined_call_operand.hbm [shape: bf16[768,512], index: 2, kind: input, shape index: {}]
  %s3 = inlined_call_operand.hbm [shape: bf16[768,512], index: 3, kind: input, shape index: {}]
  %s4 = inlined_call_operand.vmem [shape: f32[1,512], index: 4, kind: input, shape index: {}]
  %s5 = inlined_call_operand.hbm [shape: bf16[512,128], index: 5, kind: input, shape index: {}]
  %s6 = inlined_call_operand.vmem [shape: f32[1,128], index: 6, kind: input, shape index: {}]
  %s7 = inlined_call_operand.hbm [shape: bf16[2,128], index: 7, kind: output, shape index: {}]
  %s8 = sld [smem:[#allocation0]]
  $region58: #{tpu_custom_call.1} parent=0
    _
  %s10 = ssub.s32 1, %s8
  %s11 = scalar_select 0, %s10, %s8
  $region1: #{tpu_custom_call.1} parent=0
    #allocation2 [shape = 'u8[3072]{0}', space=vmem, size = 0xc00, scoped, tag = 'input window, operand 0, single buffered']
    #allocation3 [shape = 's32[1]{0}', space=sflag, size = 0x4, scoped, tag = 'scoped memory for tpu_custom_call.1']
    #allocation4 [shape = 's32[1]{0}', space=sflag, size = 0x4, scoped, tag = 'scoped memory for tpu_custom_call.1']
    #allocation5 [shape = 'u8[3072]{0}', space=vmem, size = 0xc00, scoped, tag = 'input window, operand 1, single buffered']
    #allocation6 [shape = 's32[1]{0}', space=sflag, size = 0x4, scoped, tag = 'scoped memory for tpu_custom_call.1']
    #allocation7 [shape = 'u8[786432]{0}', space=vmem, size = 0xc0000, scoped, tag = 'input window, operand 2, single buffered']
    #allocation8 [shape = 'u8[786432]{0}', space=vmem, size = 0xc0000, scoped, tag = 'input window, operand 3, single buffered']
    #allocation9 [shape = 's32[1]{0}', space=sflag, size = 0x4, scoped, tag = 'scoped memory for tpu_custom_call.1']
    #allocation10 [shape = 'u8[131072]{0}', space=vmem, size = 0x20000, scoped, tag = 'input window, operand 5, single buffered']
    #allocation11 [shape = 'u8[512]{0}', space=vmem, size = 0x400, scoped, tag = 'output window, operand 0, single buffered']
    %12 = vsyncpa [#allocation3], 0
    %13 = vsyncpa [#allocation6], 0
    %14 = vsyncpa [#allocation9], 0
    %15 = vsyncpa [#allocation4], 0
    // Predicated region
    $region2: #{tpu_custom_call.1} parent=1 // pred_check
      _
    $region3: #{tpu_custom_call.1} parent=1 // pred_check_branch
      %17 = sbr.rel (0) target = $region5
    $region4: #{tpu_custom_call.1} parent=1 // pred_region
      %s19 = ssub.s32 96, 96
      %20 = vsyncadd [#allocation3], %s19
      %s22 = sshll.u32 [#allocation2], 4
      %s23 = int_to_ptr.vmem [resolvable:$true] %s22
      %25 = dma.hbm_to_vmem [thread:$0]  %s0, 96, %s23, [#allocation3]
    $region5: #{tpu_custom_call.1} parent=1 // pred_fallthru
      _
    // Predicated region
    $region6: #{tpu_custom_call.1} parent=1 // pred_check
      _
    $region7: #{tpu_custom_call.1} parent=1 // pred_check_branch
      %27 = sbr.rel (0) target = $region9
    $region8: #{tpu_custom_call.1} parent=1 // pred_region
      %s29 = ssub.s32 96, 96
      %30 = vsyncadd [#allocation6], %s29
      %s32 = sshll.u32 [#allocation5], 4
      %s33 = int_to_ptr.vmem [resolvable:$true] %s32
      %35 = dma.hbm_to_vmem [thread:$0]  %s1, 96, %s33, [#allocation6]
    $region9: #{tpu_custom_call.1} parent=1 // pred_fallthru
      _
    // Predicated region
    $region10: #{tpu_custom_call.1} parent=1 // pred_check
      _
    $region11: #{tpu_custom_call.1} parent=1 // pred_check_branch
      %37 = sbr.rel (0) target = $region13
    $region12: #{tpu_custom_call.1} parent=1 // pred_region
      %s39 = ssub.s32 24576, 24576
      %40 = vsyncadd [#allocation6], %s39
      %s41 = sshll.u32 [#allocation7], 4
      %s42 = int_to_ptr.vmem [resolvable:$true] %s41
      %47 = dma.hbm_to_vmem [thread:$0]  %s2, 24576, %s42, [#allocation6], 256, 256, 16
    $region13: #{tpu_custom_call.1} parent=1 // pred_fallthru
      _
    // Predicated region
    $region14: #{tpu_custom_call.1} parent=1 // pred_check
      _
    $region15: #{tpu_custom_call.1} parent=1 // pred_check_branch
      %49 = sbr.rel (0) target = $region17
    $region16: #{tpu_custom_call.1} parent=1 // pred_region
      %s51 = ssub.s32 24576, 24576
      %52 = vsyncadd [#allocation9], %s51
      %s53 = sshll.u32 [#allocation8], 4
      %s54 = int_to_ptr.vmem [resolvable:$true] %s53
      %59 = dma.hbm_to_vmem [thread:$0]  %s3, 24576, %s54, [#allocation9], 256, 256, 16
    $region17: #{tpu_custom_call.1} parent=1 // pred_fallthru
      _
    // Predicated region
    $region18: #{tpu_custom_call.1} parent=1 // pred_check
      _
    $region19: #{tpu_custom_call.1} parent=1 // pred_check_branch
      %61 = sbr.rel (0) target = $region21
    $region20: #{tpu_custom_call.1} parent=1 // pred_region
      _
    $region21: #{tpu_custom_call.1} parent=1 // pred_fallthru
      _
    // Predicated region
    $region22: #{tpu_custom_call.1} parent=1 // pred_check
      _
    $region23: #{tpu_custom_call.1} parent=1 // pred_check_branch
      %63 = sbr.rel (0) target = $region25
    $region24: #{tpu_custom_call.1} parent=1 // pred_region
      %s65 = ssub.s32 4096, 4096
      %66 = vsyncadd [#allocation9], %s65
      %s67 = sshll.u32 [#allocation10], 4
      %s68 = int_to_ptr.vmem [resolvable:$true] %s67
      %73 = dma.hbm_to_vmem [thread:$0]  %s5, 4096, %s68, [#allocation9], 64, 64, 4
    $region25: #{tpu_custom_call.1} parent=1 // pred_fallthru
      _
    // Predicated region
    $region26: #{tpu_custom_call.1} parent=1 // pred_check
      _
    $region27: #{tpu_custom_call.1} parent=1 // pred_check_branch
      %75 = sbr.rel (0) target = $region29
    $region28: #{tpu_custom_call.1} parent=1 // pred_region
      _
    $region29: #{tpu_custom_call.1} parent=1 // pred_fallthru
      _
    // Predicated region
    $region30: #{tpu_custom_call.1} parent=1 // pred_check
      _
    $region31: #{tpu_custom_call.1} parent=1 // pred_check_branch
      %77 = sbr.rel (0) target = $region33
    $region32: #{tpu_custom_call.1} parent=1 // pred_region
      %78 = dma.done [#allocation3], 96
    $region33: #{tpu_custom_call.1} parent=1 // pred_fallthru
      _
    // Predicated region
    $region34: #{tpu_custom_call.1} parent=1 // pred_check
      _
    $region35: #{tpu_custom_call.1} parent=1 // pred_check_branch
      %80 = sbr.rel (0) target = $region37
    $region36: #{tpu_custom_call.1} parent=1 // pred_region
      %81 = dma.done [#allocation6], 96
    $region37: #{tpu_custom_call.1} parent=1 // pred_fallthru
      _
    // Predicated region
    $region38: #{tpu_custom_call.1} parent=1 // pred_check
      _
    $region39: #{tpu_custom_call.1} parent=1 // pred_check_branch
      %83 = sbr.rel (0) target = $region41
    $region40: #{tpu_custom_call.1} parent=1 // pred_region
      %84 = dma.done [#allocation6], 24576
    $region41: #{tpu_custom_call.1} parent=1 // pred_fallthru
      _
    // Predicated region
    $region42: #{tpu_custom_call.1} parent=1 // pred_check
      _
    $region43: #{tpu_custom_call.1} parent=1 // pred_check_branch
      %86 = sbr.rel (0) target = $region45
    $region44: #{tpu_custom_call.1} parent=1 // pred_region
      %87 = dma.done [#allocation9], 24576
    $region45: #{tpu_custom_call.1} parent=1 // pred_fallthru
      _
    // Predicated region
    $region46: #{tpu_custom_call.1} parent=1 // pred_check
      _
    $region47: #{tpu_custom_call.1} parent=1 // pred_check_branch
      %89 = sbr.rel (0) target = $region49
    $region48: #{tpu_custom_call.1} parent=1 // pred_region
      %90 = dma.done [#allocation9], 4096
    $region49: #{tpu_custom_call.1} parent=1 // pred_fallthru
      _
    %v92 = vld [vmem:[#allocation2] sm:$0x3f]
    %v93 = vld [vmem:[#allocation7] sm:$0xff]
    %v94 = vld [vmem:[#allocation7 + $0x8] sm:$0xff]
    %v95 = vld [vmem:[#allocation7 + $0x10] sm:$0xff]
    %v96 = vld [vmem:[#allocation7 + $0x18] sm:$0xff]
    %v97 = vld [vmem:[#allocation7 + $0x20] sm:$0xff]
    %v98 = vld [vmem:[#allocation7 + $0x28] sm:$0xff]
    %v99 = vld [vmem:[#allocation7 + $0x30] sm:$0xff]
    %v100 = vld [vmem:[#allocation7 + $0x38] sm:$0xff]
    %v101 = vld [vmem:[#allocation7 + $0x40] sm:$0xff]
    %v102 = vld [vmem:[#allocation7 + $0x48] sm:$0xff]
    %v103 = vld [vmem:[#allocation7 + $0x50] sm:$0xff]
    %v104 = vld [vmem:[#allocation7 + $0x58] sm:$0xff]
    %v105 = vld [vmem:[#allocation7 + $0x60] sm:$0xff]
    %v106 = vld [vmem:[#allocation7 + $0x68] sm:$0xff]
    %v107 = vld [vmem:[#allocation7 + $0x70] sm:$0xff]
    %v108 = vld [vmem:[#allocation7 + $0x78] sm:$0xff]
    %v109 = vld [vmem:[#allocation7 + $0x80] sm:$0xff]
    %v110 = vld [vmem:[#allocation7 + $0x88] sm:$0xff]
    %v111 = vld [vmem:[#allocation7 + $0x90] sm:$0xff]
    %v112 = vld [vmem:[#allocation7 + $0x98] sm:$0xff]
    %v113 = vld [vmem:[#allocation7 + $0xa0] sm:$0xff]
    %v114 = vld [vmem:[#allocation7 + $0xa8] sm:$0xff]
    %v115 = vld [vmem:[#allocation7 + $0xb0] sm:$0xff]
    %v116 = vld [vmem:[#allocation7 + $0xb8] sm:$0xff]
    %v117 = vld [vmem:[#allocation7 + $0xc0] sm:$0xff]
    %v118 = vld [vmem:[#allocation7 + $0xc8] sm:$0xff]
    %v119 = vld [vmem:[#allocation7 + $0xd0] sm:$0xff]
    %v120 = vld [vmem:[#allocation7 + $0xd8] sm:$0xff]
    %v121 = vld [vmem:[#allocation7 + $0xe0] sm:$0xff]
    %v122 = vld [vmem:[#allocation7 + $0xe8] sm:$0xff]
    %v123 = vld [vmem:[#allocation7 + $0xf0] sm:$0xff]
    %v124 = vld [vmem:[#allocation7 + $0xf8] sm:$0xff]
    %v125 = vld [vmem:[#allocation7 + $0x100] sm:$0xff]
    %v126 = vld [vmem:[#allocation7 + $0x108] sm:$0xff]
    %v127 = vld [vmem:[#allocation7 + $0x110] sm:$0xff]
    %v128 = vld [vmem:[#allocation7 + $0x118] sm:$0xff]
    %v129 = vld [vmem:[#allocation7 + $0x120] sm:$0xff]
    %v130 = vld [vmem:[#allocation7 + $0x128] sm:$0xff]
    %v131 = vld [vmem:[#allocation7 + $0x130] sm:$0xff]
    %v132 = vld [vmem:[#allocation7 + $0x138] sm:$0xff]
    %v133 = vld [vmem:[#allocation7 + $0x140] sm:$0xff]
    %v134 = vld [vmem:[#allocation7 + $0x148] sm:$0xff]
    %v135 = vld [vmem:[#allocation7 + $0x150] sm:$0xff]
    %v136 = vld [vmem:[#allocation7 + $0x158] sm:$0xff]
    %v137 = vld [vmem:[#allocation7 + $0x160] sm:$0xff]
    %v138 = vld [vmem:[#allocation7 + $0x168] sm:$0xff]
    %v139 = vld [vmem:[#allocation7 + $0x170] sm:$0xff]
    %v140 = vld [vmem:[#allocation7 + $0x178] sm:$0xff]
    %v141 = vld [vmem:[#allocation7 + $0x180] sm:$0xff]
    %v142 = vld [vmem:[#allocation7 + $0x188] sm:$0xff]
    %v143 = vld [vmem:[#allocation7 + $0x190] sm:$0xff]
    %v144 = vld [vmem:[#allocation7 + $0x198] sm:$0xff]
    %v145 = vld [vmem:[#allocation7 + $0x1a0] sm:$0xff]
    %v146 = vld [vmem:[#allocation7 + $0x1a8] sm:$0xff]
    %v147 = vld [vmem:[#allocation7 + $0x1b0] sm:$0xff]
    %v148 = vld [vmem:[#allocation7 + $0x1b8] sm:$0xff]
    %v149 = vld [vmem:[#allocation7 + $0x1c0] sm:$0xff]
    %v150 = vld [vmem:[#allocation7 + $0x1c8] sm:$0xff]
    %v151 = vld [vmem:[#allocation7 + $0x1d0] sm:$0xff]
    %v152 = vld [vmem:[#allocation7 + $0x1d8] sm:$0xff]
    %v153 = vld [vmem:[#allocation7 + $0x1e0] sm:$0xff]
    %v154 = vld [vmem:[#allocation7 + $0x1e8] sm:$0xff]
    %v155 = vld [vmem:[#allocation7 + $0x1f0] sm:$0xff]
    %v156 = vld [vmem:[#allocation7 + $0x1f8] sm:$0xff]
    %v157 = vld [vmem:[#allocation7 + $0x200] sm:$0xff]
    %v158 = vld [vmem:[#allocation7 + $0x208] sm:$0xff]
    %v159 = vld [vmem:[#allocation7 + $0x210] sm:$0xff]
    %v160 = vld [vmem:[#allocation7 + $0x218] sm:$0xff]
    %v161 = vld [vmem:[#allocation7 + $0x220] sm:$0xff]
    %v162 = vld [vmem:[#allocation7 + $0x228] sm:$0xff]
    %v163 = vld [vmem:[#allocation7 + $0x230] sm:$0xff]
    %v164 = vld [vmem:[#allocation7 + $0x238] sm:$0xff]
    %v165 = vld [vmem:[#allocation7 + $0x240] sm:$0xff]
    %v166 = vld [vmem:[#allocation7 + $0x248] sm:$0xff]
    %v167 = vld [vmem:[#allocation7 + $0x250] sm:$0xff]
    %v168 = vld [vmem:[#allocation7 + $0x258] sm:$0xff]
    %v169 = vld [vmem:[#allocation7 + $0x260] sm:$0xff]
    %v170 = vld [vmem:[#allocation7 + $0x268] sm:$0xff]
    %v171 = vld [vmem:[#allocation7 + $0x270] sm:$0xff]
    %v172 = vld [vmem:[#allocation7 + $0x278] sm:$0xff]
    %v173 = vld [vmem:[#allocation7 + $0x280] sm:$0xff]
    %v174 = vld [vmem:[#allocation7 + $0x288] sm:$0xff]
    %v175 = vld [vmem:[#allocation7 + $0x290] sm:$0xff]
    %v176 = vld [vmem:[#allocation7 + $0x298] sm:$0xff]
    %v177 = vld [vmem:[#allocation7 + $0x2a0] sm:$0xff]
    %v178 = vld [vmem:[#allocation7 + $0x2a8] sm:$0xff]
    %v179 = vld [vmem:[#allocation7 + $0x2b0] sm:$0xff]
    %v180 = vld [vmem:[#allocation7 + $0x2b8] sm:$0xff]
    %v181 = vld [vmem:[#allocation7 + $0x2c0] sm:$0xff]
    %v182 = vld [vmem:[#allocation7 + $0x2c8] sm:$0xff]
    %v183 = vld [vmem:[#allocation7 + $0x2d0] sm:$0xff]
    %v184 = vld [vmem:[#allocation7 + $0x2d8] sm:$0xff]
    %v185 = vld [vmem:[#allocation7 + $0x2e0] sm:$0xff]
    %v186 = vld [vmem:[#allocation7 + $0x2e8] sm:$0xff]
    %v187 = vld [vmem:[#allocation7 + $0x2f0] sm:$0xff]
    %v188 = vld [vmem:[#allocation7 + $0x2f8] sm:$0xff]
    %v189 = vld [vmem:[#allocation7 + $0x300] sm:$0xff]
    %v190 = vld [vmem:[#allocation7 + $0x308] sm:$0xff]
    %v191 = vld [vmem:[#allocation7 + $0x310] sm:$0xff]
    %v192 = vld [vmem:[#allocation7 + $0x318] sm:$0xff]
    %v193 = vld [vmem:[#allocation7 + $0x320] sm:$0xff]
    %v194 = vld [vmem:[#allocation7 + $0x328] sm:$0xff]
    %v195 = vld [vmem:[#allocation7 + $0x330] sm:$0xff]
    %v196 = vld [vmem:[#allocation7 + $0x338] sm:$0xff]
    %v197 = vld [vmem:[#allocation7 + $0x340] sm:$0xff]
    %v198 = vld [vmem:[#allocation7 + $0x348] sm:$0xff]
    %v199 = vld [vmem:[#allocation7 + $0x350] sm:$0xff]
    %v200 = vld [vmem:[#allocation7 + $0x358] sm:$0xff]
    %v201 = vld [vmem:[#allocation7 + $0x360] sm:$0xff]
    %v202 = vld [vmem:[#allocation7 + $0x368] sm:$0xff]
    %v203 = vld [vmem:[#allocation7 + $0x370] sm:$0xff]
    %v204 = vld [vmem:[#allocation7 + $0x378] sm:$0xff]
    %v205 = vld [vmem:[#allocation7 + $0x380] sm:$0xff]
    %v206 = vld [vmem:[#allocation7 + $0x388] sm:$0xff]
    %v207 = vld [vmem:[#allocation7 + $0x390] sm:$0xff]
    %v208 = vld [vmem:[#allocation7 + $0x398] sm:$0xff]
    %v209 = vld [vmem:[#allocation7 + $0x3a0] sm:$0xff]
    %v210 = vld [vmem:[#allocation7 + $0x3a8] sm:$0xff]
    %v211 = vld [vmem:[#allocation7 + $0x3b0] sm:$0xff]
    %v212 = vld [vmem:[#allocation7 + $0x3b8] sm:$0xff]
    %v213 = vld [vmem:[#allocation7 + $0x3c0] sm:$0xff]
    %v214 = vld [vmem:[#allocation7 + $0x3c8] sm:$0xff]
    %v215 = vld [vmem:[#allocation7 + $0x3d0] sm:$0xff]
    %v216 = vld [vmem:[#allocation7 + $0x3d8] sm:$0xff]
    %v217 = vld [vmem:[#allocation7 + $0x3e0] sm:$0xff]
    %v218 = vld [vmem:[#allocation7 + $0x3e8] sm:$0xff]
    %v219 = vld [vmem:[#allocation7 + $0x3f0] sm:$0xff]
    %v220 = vld [vmem:[#allocation7 + $0x3f8] sm:$0xff]
    %v221 = vld [vmem:[#allocation7 + $0x400] sm:$0xff]
    %v222 = vld [vmem:[#allocation7 + $0x408] sm:$0xff]
    %v223 = vld [vmem:[#allocation7 + $0x410] sm:$0xff]
    %v224 = vld [vmem:[#allocation7 + $0x418] sm:$0xff]
    %v225 = vld [vmem:[#allocation7 + $0x420] sm:$0xff]
    %v226 = vld [vmem:[#allocation7 + $0x428] sm:$0xff]
    %v227 = vld [vmem:[#allocation7 + $0x430] sm:$0xff]
    %v228 = vld [vmem:[#allocation7 + $0x438] sm:$0xff]
    %v229 = vld [vmem:[#allocation7 + $0x440] sm:$0xff]
    %v230 = vld [vmem:[#allocation7 + $0x448] sm:$0xff]
    %v231 = vld [vmem:[#allocation7 + $0x450] sm:$0xff]
    %v232 = vld [vmem:[#allocation7 + $0x458] sm:$0xff]
    %v233 = vld [vmem:[#allocation7 + $0x460] sm:$0xff]
    %v234 = vld [vmem:[#allocation7 + $0x468] sm:$0xff]
    %v235 = vld [vmem:[#allocation7 + $0x470] sm:$0xff]
    %v236 = vld [vmem:[#allocation7 + $0x478] sm:$0xff]
    %v237 = vld [vmem:[#allocation7 + $0x480] sm:$0xff]
    %v238 = vld [vmem:[#allocation7 + $0x488] sm:$0xff]
    %v239 = vld [vmem:[#allocation7 + $0x490] sm:$0xff]
    %v240 = vld [vmem:[#allocation7 + $0x498] sm:$0xff]
    %v241 = vld [vmem:[#allocation7 + $0x4a0] sm:$0xff]
    %v242 = vld [vmem:[#allocation7 + $0x4a8] sm:$0xff]
    %v243 = vld [vmem:[#allocation7 + $0x4b0] sm:$0xff]
    %v244 = vld [vmem:[#allocation7 + $0x4b8] sm:$0xff]
    %v245 = vld [vmem:[#allocation7 + $0x4c0] sm:$0xff]
    %v246 = vld [vmem:[#allocation7 + $0x4c8] sm:$0xff]
    %v247 = vld [vmem:[#allocation7 + $0x4d0] sm:$0xff]
    %v248 = vld [vmem:[#allocation7 + $0x4d8] sm:$0xff]
    %v249 = vld [vmem:[#allocation7 + $0x4e0] sm:$0xff]
    %v250 = vld [vmem:[#allocation7 + $0x4e8] sm:$0xff]
    %v251 = vld [vmem:[#allocation7 + $0x4f0] sm:$0xff]
    %v252 = vld [vmem:[#allocation7 + $0x4f8] sm:$0xff]
    %v253 = vld [vmem:[#allocation7 + $0x500] sm:$0xff]
    %v254 = vld [vmem:[#allocation7 + $0x508] sm:$0xff]
    %v255 = vld [vmem:[#allocation7 + $0x510] sm:$0xff]
    %v256 = vld [vmem:[#allocation7 + $0x518] sm:$0xff]
    %v257 = vld [vmem:[#allocation7 + $0x520] sm:$0xff]
    %v258 = vld [vmem:[#allocation7 + $0x528] sm:$0xff]
    %v259 = vld [vmem:[#allocation7 + $0x530] sm:$0xff]
    %v260 = vld [vmem:[#allocation7 + $0x538] sm:$0xff]
    %v261 = vld [vmem:[#allocation7 + $0x540] sm:$0xff]
    %v262 = vld [vmem:[#allocation7 + $0x548] sm:$0xff]
    %v263 = vld [vmem:[#allocation7 + $0x550] sm:$0xff]
    %v264 = vld [vmem:[#allocation7 + $0x558] sm:$0xff]
    %v265 = vld [vmem:[#allocation7 + $0x560] sm:$0xff]
    %v266 = vld [vmem:[#allocation7 + $0x568] sm:$0xff]
    %v267 = vld [vmem:[#allocation7 + $0x570] sm:$0xff]
    %v268 = vld [vmem:[#allocation7 + $0x578] sm:$0xff]
    %v269 = vld [vmem:[#allocation7 + $0x580] sm:$0xff]
    %v270 = vld [vmem:[#allocation7 + $0x588] sm:$0xff]
    %v271 = vld [vmem:[#allocation7 + $0x590] sm:$0xff]
    %v272 = vld [vmem:[#allocation7 + $0x598] sm:$0xff]
    %v273 = vld [vmem:[#allocation7 + $0x5a0] sm:$0xff]
    %v274 = vld [vmem:[#allocation7 + $0x5a8] sm:$0xff]
    %v275 = vld [vmem:[#allocation7 + $0x5b0] sm:$0xff]
    %v276 = vld [vmem:[#allocation7 + $0x5b8] sm:$0xff]
    %v277 = vld [vmem:[#allocation7 + $0x5c0] sm:$0xff]
    %v278 = vld [vmem:[#allocation7 + $0x5c8] sm:$0xff]
    %v279 = vld [vmem:[#allocation7 + $0x5d0] sm:$0xff]
    %v280 = vld [vmem:[#allocation7 + $0x5d8] sm:$0xff]
    %v281 = vld [vmem:[#allocation7 + $0x5e0] sm:$0xff]
    %v282 = vld [vmem:[#allocation7 + $0x5e8] sm:$0xff]
    %v283 = vld [vmem:[#allocation7 + $0x5f0] sm:$0xff]
    %v284 = vld [vmem:[#allocation7 + $0x5f8] sm:$0xff]
    %v285 = vld [vmem:[#allocation5] sm:$0x3f]
    %v286 = vld [vmem:[#allocation8] sm:$0xff]
    %v287 = vld [vmem:[#allocation8 + $0x8] sm:$0xff]
    %v288 = vld [vmem:[#allocation8 + $0x10] sm:$0xff]
    %v289 = vld [vmem:[#allocation8 + $0x18] sm:$0xff]
    %v290 = vld [vmem:[#allocation8 + $0x20] sm:$0xff]
    %v291 = vld [vmem:[#allocation8 + $0x28] sm:$0xff]
    %v292 = vld [vmem:[#allocation8 + $0x30] sm:$0xff]
    %v293 = vld [vmem:[#allocation8 + $0x38] sm:$0xff]
    %v294 = vld [vmem:[#allocation8 + $0x40] sm:$0xff]
    %v295 = vld [vmem:[#allocation8 + $0x48] sm:$0xff]
    %v296 = vld [vmem:[#allocation8 + $0x50] sm:$0xff]
    %v297 = vld [vmem:[#allocation8 + $0x58] sm:$0xff]
    %v298 = vld [vmem:[#allocation8 + $0x60] sm:$0xff]
    %v299 = vld [vmem:[#allocation8 + $0x68] sm:$0xff]
    %v300 = vld [vmem:[#allocation8 + $0x70] sm:$0xff]
    %v301 = vld [vmem:[#allocation8 + $0x78] sm:$0xff]
    %v302 = vld [vmem:[#allocation8 + $0x80] sm:$0xff]
    %v303 = vld [vmem:[#allocation8 + $0x88] sm:$0xff]
    %v304 = vld [vmem:[#allocation8 + $0x90] sm:$0xff]
    %v305 = vld [vmem:[#allocation8 + $0x98] sm:$0xff]
    %v306 = vld [vmem:[#allocation8 + $0xa0] sm:$0xff]
    %v307 = vld [vmem:[#allocation8 + $0xa8] sm:$0xff]
    %v308 = vld [vmem:[#allocation8 + $0xb0] sm:$0xff]
    %v309 = vld [vmem:[#allocation8 + $0xb8] sm:$0xff]
    %v310 = vld [vmem:[#allocation8 + $0xc0] sm:$0xff]
    %v311 = vld [vmem:[#allocation8 + $0xc8] sm:$0xff]
    %v312 = vld [vmem:[#allocation8 + $0xd0] sm:$0xff]
    %v313 = vld [vmem:[#allocation8 + $0xd8] sm:$0xff]
    %v314 = vld [vmem:[#allocation8 + $0xe0] sm:$0xff]
    %v315 = vld [vmem:[#allocation8 + $0xe8] sm:$0xff]
    %v316 = vld [vmem:[#allocation8 + $0xf0] sm:$0xff]
    %v317 = vld [vmem:[#allocation8 + $0xf8] sm:$0xff]
    %v318 = vld [vmem:[#allocation8 + $0x100] sm:$0xff]
    %v319 = vld [vmem:[#allocation8 + $0x108] sm:$0xff]
    %v320 = vld [vmem:[#allocation8 + $0x110] sm:$0xff]
    %v321 = vld [vmem:[#allocation8 + $0x118] sm:$0xff]
    %v322 = vld [vmem:[#allocation8 + $0x120] sm:$0xff]
    %v323 = vld [vmem:[#allocation8 + $0x128] sm:$0xff]
    %v324 = vld [vmem:[#allocation8 + $0x130] sm:$0xff]
    %v325 = vld [vmem:[#allocation8 + $0x138] sm:$0xff]
    %v326 = vld [vmem:[#allocation8 + $0x140] sm:$0xff]
    %v327 = vld [vmem:[#allocation8 + $0x148] sm:$0xff]
    %v328 = vld [vmem:[#allocation8 + $0x150] sm:$0xff]
    %v329 = vld [vmem:[#allocation8 + $0x158] sm:$0xff]
    %v330 = vld [vmem:[#allocation8 + $0x160] sm:$0xff]
    %v331 = vld [vmem:[#allocation8 + $0x168] sm:$0xff]
    %v332 = vld [vmem:[#allocation8 + $0x170] sm:$0xff]
    %v333 = vld [vmem:[#allocation8 + $0x178] sm:$0xff]
    %v334 = vld [vmem:[#allocation8 + $0x180] sm:$0xff]
    %v335 = vld [vmem:[#allocation8 + $0x188] sm:$0xff]
    %v336 = vld [vmem:[#allocation8 + $0x190] sm:$0xff]
    %v337 = vld [vmem:[#allocation8 + $0x198] sm:$0xff]
    %v338 = vld [vmem:[#allocation8 + $0x1a0] sm:$0xff]
    %v339 = vld [vmem:[#allocation8 + $0x1a8] sm:$0xff]
    %v340 = vld [vmem:[#allocation8 + $0x1b0] sm:$0xff]
    %v341 = vld [vmem:[#allocation8 + $0x1b8] sm:$0xff]
    %v342 = vld [vmem:[#allocation8 + $0x1c0] sm:$0xff]
    %v343 = vld [vmem:[#allocation8 + $0x1c8] sm:$0xff]
    %v344 = vld [vmem:[#allocation8 + $0x1d0] sm:$0xff]
    %v345 = vld [vmem:[#allocation8 + $0x1d8] sm:$0xff]
    %v346 = vld [vmem:[#allocation8 + $0x1e0] sm:$0xff]
    %v347 = vld [vmem:[#allocation8 + $0x1e8] sm:$0xff]
    %v348 = vld [vmem:[#allocation8 + $0x1f0] sm:$0xff]
    %v349 = vld [vmem:[#allocation8 + $0x1f8] sm:$0xff]
    %v350 = vld [vmem:[#allocation8 + $0x200] sm:$0xff]
    %v351 = vld [vmem:[#allocation8 + $0x208] sm:$0xff]
    %v352 = vld [vmem:[#allocation8 + $0x210] sm:$0xff]
    %v353 = vld [vmem:[#allocation8 + $0x218] sm:$0xff]
    %v354 = vld [vmem:[#allocation8 + $0x220] sm:$0xff]
    %v355 = vld [vmem:[#allocation8 + $0x228] sm:$0xff]
    %v356 = vld [vmem:[#allocation8 + $0x230] sm:$0xff]
    %v357 = vld [vmem:[#allocation8 + $0x238] sm:$0xff]
    %v358 = vld [vmem:[#allocation8 + $0x240] sm:$0xff]
    %v359 = vld [vmem:[#allocation8 + $0x248] sm:$0xff]
    %v360 = vld [vmem:[#allocation8 + $0x250] sm:$0xff]
    %v361 = vld [vmem:[#allocation8 + $0x258] sm:$0xff]
    %v362 = vld [vmem:[#allocation8 + $0x260] sm:$0xff]
    %v363 = vld [vmem:[#allocation8 + $0x268] sm:$0xff]
    %v364 = vld [vmem:[#allocation8 + $0x270] sm:$0xff]
    %v365 = vld [vmem:[#allocation8 + $0x278] sm:$0xff]
    %v366 = vld [vmem:[#allocation8 + $0x280] sm:$0xff]
    %v367 = vld [vmem:[#allocation8 + $0x288] sm:$0xff]
    %v368 = vld [vmem:[#allocation8 + $0x290] sm:$0xff]
    %v369 = vld [vmem:[#allocation8 + $0x298] sm:$0xff]
    %v370 = vld [vmem:[#allocation8 + $0x2a0] sm:$0xff]
    %v371 = vld [vmem:[#allocation8 + $0x2a8] sm:$0xff]
    %v372 = vld [vmem:[#allocation8 + $0x2b0] sm:$0xff]
    %v373 = vld [vmem:[#allocation8 + $0x2b8] sm:$0xff]
    %v374 = vld [vmem:[#allocation8 + $0x2c0] sm:$0xff]
    %v375 = vld [vmem:[#allocation8 + $0x2c8] sm:$0xff]
    %v376 = vld [vmem:[#allocation8 + $0x2d0] sm:$0xff]
    %v377 = vld [vmem:[#allocation8 + $0x2d8] sm:$0xff]
    %v378 = vld [vmem:[#allocation8 + $0x2e0] sm:$0xff]
    %v379 = vld [vmem:[#allocation8 + $0x2e8] sm:$0xff]
    %v380 = vld [vmem:[#allocation8 + $0x2f0] sm:$0xff]
    %v381 = vld [vmem:[#allocation8 + $0x2f8] sm:$0xff]
    %v382 = vld [vmem:[#allocation8 + $0x300] sm:$0xff]
    %v383 = vld [vmem:[#allocation8 + $0x308] sm:$0xff]
    %v384 = vld [vmem:[#allocation8 + $0x310] sm:$0xff]
    %v385 = vld [vmem:[#allocation8 + $0x318] sm:$0xff]
    %v386 = vld [vmem:[#allocation8 + $0x320] sm:$0xff]
    %v387 = vld [vmem:[#allocation8 + $0x328] sm:$0xff]
    %v388 = vld [vmem:[#allocation8 + $0x330] sm:$0xff]
    %v389 = vld [vmem:[#allocation8 + $0x338] sm:$0xff]
    %v390 = vld [vmem:[#allocation8 + $0x340] sm:$0xff]
    %v391 = vld [vmem:[#allocation8 + $0x348] sm:$0xff]
    %v392 = vld [vmem:[#allocation8 + $0x350] sm:$0xff]
    %v393 = vld [vmem:[#allocation8 + $0x358] sm:$0xff]
    %v394 = vld [vmem:[#allocation8 + $0x360] sm:$0xff]
    %v395 = vld [vmem:[#allocation8 + $0x368] sm:$0xff]
    %v396 = vld [vmem:[#allocation8 + $0x370] sm:$0xff]
    %v397 = vld [vmem:[#allocation8 + $0x378] sm:$0xff]
    %v398 = vld [vmem:[#allocation8 + $0x380] sm:$0xff]
    %v399 = vld [vmem:[#allocation8 + $0x388] sm:$0xff]
    %v400 = vld [vmem:[#allocation8 + $0x390] sm:$0xff]
    %v401 = vld [vmem:[#allocation8 + $0x398] sm:$0xff]
    %v402 = vld [vmem:[#allocation8 + $0x3a0] sm:$0xff]
    %v403 = vld [vmem:[#allocation8 + $0x3a8] sm:$0xff]
    %v404 = vld [vmem:[#allocation8 + $0x3b0] sm:$0xff]
    %v405 = vld [vmem:[#allocation8 + $0x3b8] sm:$0xff]
    %v406 = vld [vmem:[#allocation8 + $0x3c0] sm:$0xff]
    %v407 = vld [vmem:[#allocation8 + $0x3c8] sm:$0xff]
    %v408 = vld [vmem:[#allocation8 + $0x3d0] sm:$0xff]
    %v409 = vld [vmem:[#allocation8 + $0x3d8] sm:$0xff]
    %v410 = vld [vmem:[#allocation8 + $0x3e0] sm:$0xff]
    %v411 = vld [vmem:[#allocation8 + $0x3e8] sm:$0xff]
    %v412 = vld [vmem:[#allocation8 + $0x3f0] sm:$0xff]
    %v413 = vld [vmem:[#allocation8 + $0x3f8] sm:$0xff]
    %v414 = vld [vmem:[#allocation8 + $0x400] sm:$0xff]
    %v415 = vld [vmem:[#allocation8 + $0x408] sm:$0xff]
    %v416 = vld [vmem:[#allocation8 + $0x410] sm:$0xff]
    %v417 = vld [vmem:[#allocation8 + $0x418] sm:$0xff]
    %v418 = vld [vmem:[#allocation8 + $0x420] sm:$0xff]
    %v419 = vld [vmem:[#allocation8 + $0x428] sm:$0xff]
    %v420 = vld [vmem:[#allocation8 + $0x430] sm:$0xff]
    %v421 = vld [vmem:[#allocation8 + $0x438] sm:$0xff]
    %v422 = vld [vmem:[#allocation8 + $0x440] sm:$0xff]
    %v423 = vld [vmem:[#allocation8 + $0x448] sm:$0xff]
    %v424 = vld [vmem:[#allocation8 + $0x450] sm:$0xff]
    %v425 = vld [vmem:[#allocation8 + $0x458] sm:$0xff]
    %v426 = vld [vmem:[#allocation8 + $0x460] sm:$0xff]
    %v427 = vld [vmem:[#allocation8 + $0x468] sm:$0xff]
    %v428 = vld [vmem:[#allocation8 + $0x470] sm:$0xff]
    %v429 = vld [vmem:[#allocation8 + $0x478] sm:$0xff]
    %v430 = vld [vmem:[#allocation8 + $0x480] sm:$0xff]
    %v431 = vld [vmem:[#allocation8 + $0x488] sm:$0xff]
    %v432 = vld [vmem:[#allocation8 + $0x490] sm:$0xff]
    %v433 = vld [vmem:[#allocation8 + $0x498] sm:$0xff]
    %v434 = vld [vmem:[#allocation8 + $0x4a0] sm:$0xff]
    %v435 = vld [vmem:[#allocation8 + $0x4a8] sm:$0xff]
    %v436 = vld [vmem:[#allocation8 + $0x4b0] sm:$0xff]
    %v437 = vld [vmem:[#allocation8 + $0x4b8] sm:$0xff]
    %v438 = vld [vmem:[#allocation8 + $0x4c0] sm:$0xff]
    %v439 = vld [vmem:[#allocation8 + $0x4c8] sm:$0xff]
    %v440 = vld [vmem:[#allocation8 + $0x4d0] sm:$0xff]
    %v441 = vld [vmem:[#allocation8 + $0x4d8] sm:$0xff]
    %v442 = vld [vmem:[#allocation8 + $0x4e0] sm:$0xff]
    %v443 = vld [vmem:[#allocation8 + $0x4e8] sm:$0xff]
    %v444 = vld [vmem:[#allocation8 + $0x4f0] sm:$0xff]
    %v445 = vld [vmem:[#allocation8 + $0x4f8] sm:$0xff]
    %v446 = vld [vmem:[#allocation8 + $0x500] sm:$0xff]
    %v447 = vld [vmem:[#allocation8 + $0x508] sm:$0xff]
    %v448 = vld [vmem:[#allocation8 + $0x510] sm:$0xff]
    %v449 = vld [vmem:[#allocation8 + $0x518] sm:$0xff]
    %v450 = vld [vmem:[#allocation8 + $0x520] sm:$0xff]
    %v451 = vld [vmem:[#allocation8 + $0x528] sm:$0xff]
    %v452 = vld [vmem:[#allocation8 + $0x530] sm:$0xff]
    %v453 = vld [vmem:[#allocation8 + $0x538] sm:$0xff]
    %v454 = vld [vmem:[#allocation8 + $0x540] sm:$0xff]
    %v455 = vld [vmem:[#allocation8 + $0x548] sm:$0xff]
    %v456 = vld [vmem:[#allocation8 + $0x550] sm:$0xff]
    %v457 = vld [vmem:[#allocation8 + $0x558] sm:$0xff]
    %v458 = vld [vmem:[#allocation8 + $0x560] sm:$0xff]
    %v459 = vld [vmem:[#allocation8 + $0x568] sm:$0xff]
    %v460 = vld [vmem:[#allocation8 + $0x570] sm:$0xff]
    %v461 = vld [vmem:[#allocation8 + $0x578] sm:$0xff]
    %v462 = vld [vmem:[#allocation8 + $0x580] sm:$0xff]
    %v463 = vld [vmem:[#allocation8 + $0x588] sm:$0xff]
    %v464 = vld [vmem:[#allocation8 + $0x590] sm:$0xff]
    %v465 = vld [vmem:[#allocation8 + $0x598] sm:$0xff]
    %v466 = vld [vmem:[#allocation8 + $0x5a0] sm:$0xff]
    %v467 = vld [vmem:[#allocation8 + $0x5a8] sm:$0xff]
    %v468 = vld [vmem:[#allocation8 + $0x5b0] sm:$0xff]
    %v469 = vld [vmem:[#allocation8 + $0x5b8] sm:$0xff]
    %v470 = vld [vmem:[#allocation8 + $0x5c0] sm:$0xff]
    %v471 = vld [vmem:[#allocation8 + $0x5c8] sm:$0xff]
    %v472 = vld [vmem:[#allocation8 + $0x5d0] sm:$0xff]
    %v473 = vld [vmem:[#allocation8 + $0x5d8] sm:$0xff]
    %v474 = vld [vmem:[#allocation8 + $0x5e0] sm:$0xff]
    %v475 = vld [vmem:[#allocation8 + $0x5e8] sm:$0xff]
    %v476 = vld [vmem:[#allocation8 + $0x5f0] sm:$0xff]
    %v477 = vld [vmem:[#allocation8 + $0x5f8] sm:$0xff]
    %v479 = vcombine.high %v285, %v285
    %v481 = vunpack.c.l.s4 1966171168
    %v482 = vunpack.c.0.s8 %v481
    %v483 = vlaneseq
    %v484 = vshrl.u32 %v483, 7
    %v485 = vsub.s32 %v482, %v484
    %v486 = vrot.slane %v285, %v485
    %v488 = vunpack.c.l.s4 1966171168
    %v489 = vunpack.c.0.s8 %v488
    %v490 = vlaneseq
    %v491 = vshrl.u32 %v490, 7
    %v492 = vsub.s32 %v489, %v491
    %v493 = vrot.slane %v479, %v492
    %v494 = vcombine.high %v486, %v486
    %v495 = vcombine.high %v493, %v493
    %v497 = vunpack.c.l.s4 1966171168
    %v498 = vunpack.c.0.s8 %v497
    %v499 = vlaneseq
    %v500 = vshrl.u32 %v499, 7
    %v501 = vsub.s32 %v498, %v500
    %v502 = vrot.slane %v486, %v501
    %v504 = vunpack.c.l.s4 1966171168
    %v505 = vunpack.c.0.s8 %v504
    %v506 = vlaneseq
    %v507 = vshrl.u32 %v506, 7
    %v508 = vsub.s32 %v505, %v507
    %v509 = vrot.slane %v493, %v508
    %v511 = vunpack.c.l.s4 1966171168
    %v512 = vunpack.c.0.s8 %v511
    %v513 = vlaneseq
    %v514 = vshrl.u32 %v513, 7
    %v515 = vsub.s32 %v512, %v514
    %v516 = vrot.slane %v494, %v515
    %v518 = vunpack.c.l.s4 1966171168
    %v519 = vunpack.c.0.s8 %v518
    %v520 = vlaneseq
    %v521 = vshrl.u32 %v520, 7
    %v522 = vsub.s32 %v519, %v521
    %v523 = vrot.slane %v495, %v522
    %v524 = vcombine.high %v502, %v502
    %v525 = vcombine.high %v516, %v516
    %v724 = vunpack.c.l.b16 %v286
    %v725 = vunpack.c.h.b16 %v286
    %v726 = vunpack.c.l.b16 %v287
    %v727 = vunpack.c.h.b16 %v287
    %v728 = vunpack.c.l.b16 %v288
    %v729 = vunpack.c.h.b16 %v288
    %v730 = vunpack.c.l.b16 %v289
    %v731 = vunpack.c.h.b16 %v289
    %v732 = vunpack.c.l.b16 %v290
    %v733 = vunpack.c.h.b16 %v290
    %v734 = vunpack.c.l.b16 %v291
    %v735 = vunpack.c.h.b16 %v291
    %v736 = vunpack.c.l.b16 %v292
    %v737 = vunpack.c.h.b16 %v292
    %v738 = vunpack.c.l.b16 %v293
    %v739 = vunpack.c.h.b16 %v293
    %v740 = vunpack.c.l.b16 %v294
    %v741 = vunpack.c.h.b16 %v294
    %v742 = vunpack.c.l.b16 %v295
    %v743 = vunpack.c.h.b16 %v295
    %v744 = vunpack.c.l.b16 %v296
    %v745 = vunpack.c.h.b16 %v296
    %v746 = vunpack.c.l.b16 %v297
    %v747 = vunpack.c.h.b16 %v297
    %v748 = vunpack.c.l.b16 %v298
    %v749 = vunpack.c.h.b16 %v298
    %v750 = vunpack.c.l.b16 %v299
    %v751 = vunpack.c.h.b16 %v299
    %v752 = vunpack.c.l.b16 %v300
    %v753 = vunpack.c.h.b16 %v300
    %v754 = vunpack.c.l.b16 %v301
    %v755 = vunpack.c.h.b16 %v301
    %v756 = vunpack.c.l.b16 %v302
    %v757 = vunpack.c.h.b16 %v302
    %v758 = vunpack.c.l.b16 %v303
    %v759 = vunpack.c.h.b16 %v303
    %v760 = vunpack.c.l.b16 %v304
    %v761 = vunpack.c.h.b16 %v304
    %v762 = vunpack.c.l.b16 %v305
    %v763 = vunpack.c.h.b16 %v305
    %v764 = vunpack.c.l.b16 %v306
    %v765 = vunpack.c.h.b16 %v306
    %v766 = vunpack.c.l.b16 %v307
    %v767 = vunpack.c.h.b16 %v307
    %v768 = vunpack.c.l.b16 %v308
    %v769 = vunpack.c.h.b16 %v308
    %v770 = vunpack.c.l.b16 %v309
    %v771 = vunpack.c.h.b16 %v309
    %v772 = vunpack.c.l.b16 %v310
    %v773 = vunpack.c.h.b16 %v310
    %v774 = vunpack.c.l.b16 %v311
    %v775 = vunpack.c.h.b16 %v311
    %v776 = vunpack.c.l.b16 %v312
    %v777 = vunpack.c.h.b16 %v312
    %v778 = vunpack.c.l.b16 %v313
    %v779 = vunpack.c.h.b16 %v313
    %v780 = vunpack.c.l.b16 %v314
    %v781 = vunpack.c.h.b16 %v314
    %v782 = vunpack.c.l.b16 %v315
    %v783 = vunpack.c.h.b16 %v315
    %v784 = vunpack.c.l.b16 %v316
    %v785 = vunpack.c.h.b16 %v316
    %v786 = vunpack.c.l.b16 %v317
    %v787 = vunpack.c.h.b16 %v317
    %v788 = vunpack.c.l.b16 %v318
    %v789 = vunpack.c.h.b16 %v318
    %v790 = vunpack.c.l.b16 %v319
    %v791 = vunpack.c.h.b16 %v319
    %v792 = vunpack.c.l.b16 %v320
    %v793 = vunpack.c.h.b16 %v320
    %v794 = vunpack.c.l.b16 %v321
    %v795 = vunpack.c.h.b16 %v321
    %v796 = vunpack.c.l.b16 %v322
    %v797 = vunpack.c.h.b16 %v322
    %v798 = vunpack.c.l.b16 %v323
    %v799 = vunpack.c.h.b16 %v323
    %v800 = vunpack.c.l.b16 %v324
    %v801 = vunpack.c.h.b16 %v324
    %v802 = vunpack.c.l.b16 %v325
    %v803 = vunpack.c.h.b16 %v325
    %v804 = vunpack.c.l.b16 %v326
    %v805 = vunpack.c.h.b16 %v326
    %v806 = vunpack.c.l.b16 %v327
    %v807 = vunpack.c.h.b16 %v327
    %v808 = vunpack.c.l.b16 %v328
    %v809 = vunpack.c.h.b16 %v328
    %v810 = vunpack.c.l.b16 %v329
    %v811 = vunpack.c.h.b16 %v329
    %v812 = vunpack.c.l.b16 %v330
    %v813 = vunpack.c.h.b16 %v330
    %v814 = vunpack.c.l.b16 %v331
    %v815 = vunpack.c.h.b16 %v331
    %v816 = vunpack.c.l.b16 %v332
    %v817 = vunpack.c.h.b16 %v332
    %v818 = vunpack.c.l.b16 %v333
    %v819 = vunpack.c.h.b16 %v333
    %v820 = vunpack.c.l.b16 %v334
    %v821 = vunpack.c.h.b16 %v334
    %v822 = vunpack.c.l.b16 %v335
    %v823 = vunpack.c.h.b16 %v335
    %v824 = vunpack.c.l.b16 %v336
    %v825 = vunpack.c.h.b16 %v336
    %v826 = vunpack.c.l.b16 %v337
    %v827 = vunpack.c.h.b16 %v337
    %v828 = vunpack.c.l.b16 %v338
    %v829 = vunpack.c.h.b16 %v338
    %v830 = vunpack.c.l.b16 %v339
    %v831 = vunpack.c.h.b16 %v339
    %v832 = vunpack.c.l.b16 %v340
    %v833 = vunpack.c.h.b16 %v340
    %v834 = vunpack.c.l.b16 %v341
    %v835 = vunpack.c.h.b16 %v341
    %v836 = vunpack.c.l.b16 %v342
    %v837 = vunpack.c.h.b16 %v342
    %v838 = vunpack.c.l.b16 %v343
    %v839 = vunpack.c.h.b16 %v343
    %v840 = vunpack.c.l.b16 %v344
    %v841 = vunpack.c.h.b16 %v344
    %v842 = vunpack.c.l.b16 %v345
    %v843 = vunpack.c.h.b16 %v345
    %v844 = vunpack.c.l.b16 %v346
    %v845 = vunpack.c.h.b16 %v346
    %v846 = vunpack.c.l.b16 %v347
    %v847 = vunpack.c.h.b16 %v347
    %v848 = vunpack.c.l.b16 %v348
    %v849 = vunpack.c.h.b16 %v348
    %v850 = vunpack.c.l.b16 %v349
    %v851 = vunpack.c.h.b16 %v349
    %v852 = vunpack.c.l.b16 %v350
    %v853 = vunpack.c.h.b16 %v350
    %v854 = vunpack.c.l.b16 %v351
    %v855 = vunpack.c.h.b16 %v351
    %v856 = vunpack.c.l.b16 %v352
    %v857 = vunpack.c.h.b16 %v352
    %v858 = vunpack.c.l.b16 %v353
    %v859 = vunpack.c.h.b16 %v353
    %v860 = vunpack.c.l.b16 %v354
    %v861 = vunpack.c.h.b16 %v354
    %v862 = vunpack.c.l.b16 %v355
    %v863 = vunpack.c.h.b16 %v355
    %v864 = vunpack.c.l.b16 %v356
    %v865 = vunpack.c.h.b16 %v356
    %v866 = vunpack.c.l.b16 %v357
    %v867 = vunpack.c.h.b16 %v357
    %v868 = vunpack.c.l.b16 %v358
    %v869 = vunpack.c.h.b16 %v358
    %v870 = vunpack.c.l.b16 %v359
    %v871 = vunpack.c.h.b16 %v359
    %v872 = vunpack.c.l.b16 %v360
    %v873 = vunpack.c.h.b16 %v360
    %v874 = vunpack.c.l.b16 %v361
    %v875 = vunpack.c.h.b16 %v361
    %v876 = vunpack.c.l.b16 %v362
    %v877 = vunpack.c.h.b16 %v362
    %v878 = vunpack.c.l.b16 %v363
    %v879 = vunpack.c.h.b16 %v363
    %v880 = vunpack.c.l.b16 %v364
    %v881 = vunpack.c.h.b16 %v364
    %v882 = vunpack.c.l.b16 %v365
    %v883 = vunpack.c.h.b16 %v365
    %v884 = vunpack.c.l.b16 %v366
    %v885 = vunpack.c.h.b16 %v366
    %v886 = vunpack.c.l.b16 %v367
    %v887 = vunpack.c.h.b16 %v367
    %v888 = vunpack.c.l.b16 %v368
    %v889 = vunpack.c.h.b16 %v368
    %v890 = vunpack.c.l.b16 %v369
    %v891 = vunpack.c.h.b16 %v369
    %v892 = vunpack.c.l.b16 %v370
    %v893 = vunpack.c.h.b16 %v370
    %v894 = vunpack.c.l.b16 %v371
    %v895 = vunpack.c.h.b16 %v371
    %v896 = vunpack.c.l.b16 %v372
    %v897 = vunpack.c.h.b16 %v372
    %v898 = vunpack.c.l.b16 %v373
    %v899 = vunpack.c.h.b16 %v373
    %v900 = vunpack.c.l.b16 %v374
    %v901 = vunpack.c.h.b16 %v374
    %v902 = vunpack.c.l.b16 %v375
    %v903 = vunpack.c.h.b16 %v375
    %v904 = vunpack.c.l.b16 %v376
    %v905 = vunpack.c.h.b16 %v376
    %v906 = vunpack.c.l.b16 %v377
    %v907 = vunpack.c.h.b16 %v377
    %v908 = vunpack.c.l.b16 %v378
    %v909 = vunpack.c.h.b16 %v378
    %v910 = vunpack.c.l.b16 %v379
    %v911 = vunpack.c.h.b16 %v379
    %v912 = vunpack.c.l.b16 %v380
    %v913 = vunpack.c.h.b16 %v380
    %v914 = vunpack.c.l.b16 %v381
    %v915 = vunpack.c.h.b16 %v381
    %v916 = vunpack.c.l.b16 %v382
    %v917 = vunpack.c.h.b16 %v382
    %v918 = vunpack.c.l.b16 %v383
    %v919 = vunpack.c.h.b16 %v383
    %v920 = vunpack.c.l.b16 %v384
    %v921 = vunpack.c.h.b16 %v384
    %v922 = vunpack.c.l.b16 %v385
    %v923 = vunpack.c.h.b16 %v385
    %v924 = vunpack.c.l.b16 %v386
    %v925 = vunpack.c.h.b16 %v386
    %v926 = vunpack.c.l.b16 %v387
    %v927 = vunpack.c.h.b16 %v387
    %v928 = vunpack.c.l.b16 %v388
    %v929 = vunpack.c.h.b16 %v388
    %v930 = vunpack.c.l.b16 %v389
    %v931 = vunpack.c.h.b16 %v389
    %v932 = vunpack.c.l.b16 %v390
    %v933 = vunpack.c.h.b16 %v390
    %v934 = vunpack.c.l.b16 %v391
    %v935 = vunpack.c.h.b16 %v391
    %v936 = vunpack.c.l.b16 %v392
    %v937 = vunpack.c.h.b16 %v392
    %v938 = vunpack.c.l.b16 %v393
    %v939 = vunpack.c.h.b16 %v393
    %v940 = vunpack.c.l.b16 %v394
    %v941 = vunpack.c.h.b16 %v394
    %v942 = vunpack.c.l.b16 %v395
    %v943 = vunpack.c.h.b16 %v395
    %v944 = vunpack.c.l.b16 %v396
    %v945 = vunpack.c.h.b16 %v396
    %v946 = vunpack.c.l.b16 %v397
    %v947 = vunpack.c.h.b16 %v397
    %v948 = vunpack.c.l.b16 %v398
    %v949 = vunpack.c.h.b16 %v398
    %v950 = vunpack.c.l.b16 %v399
    %v951 = vunpack.c.h.b16 %v399
    %v952 = vunpack.c.l.b16 %v400
    %v953 = vunpack.c.h.b16 %v400
    %v954 = vunpack.c.l.b16 %v401
    %v955 = vunpack.c.h.b16 %v401
    %v956 = vunpack.c.l.b16 %v402
    %v957 = vunpack.c.h.b16 %v402
    %v958 = vunpack.c.l.b16 %v403
    %v959 = vunpack.c.h.b16 %v403
    %v960 = vunpack.c.l.b16 %v404
    %v961 = vunpack.c.h.b16 %v404
    %v962 = vunpack.c.l.b16 %v405
    %v963 = vunpack.c.h.b16 %v405
    %v964 = vunpack.c.l.b16 %v406
    %v965 = vunpack.c.h.b16 %v406
    %v966 = vunpack.c.l.b16 %v407
    %v967 = vunpack.c.h.b16 %v407
    %v968 = vunpack.c.l.b16 %v408
    %v969 = vunpack.c.h.b16 %v408
    %v970 = vunpack.c.l.b16 %v409
    %v971 = vunpack.c.h.b16 %v409
    %v972 = vunpack.c.l.b16 %v410
    %v973 = vunpack.c.h.b16 %v410
    %v974 = vunpack.c.l.b16 %v411
    %v975 = vunpack.c.h.b16 %v411
    %v976 = vunpack.c.l.b16 %v412
    %v977 = vunpack.c.h.b16 %v412
    %v978 = vunpack.c.l.b16 %v413
    %v979 = vunpack.c.h.b16 %v413
    %v980 = vunpack.c.l.b16 %v414
    %v981 = vunpack.c.h.b16 %v414
    %v982 = vunpack.c.l.b16 %v415
    %v983 = vunpack.c.h.b16 %v415
    %v984 = vunpack.c.l.b16 %v416
    %v985 = vunpack.c.h.b16 %v416
    %v986 = vunpack.c.l.b16 %v417
    %v987 = vunpack.c.h.b16 %v417
    %v988 = vunpack.c.l.b16 %v418
    %v989 = vunpack.c.h.b16 %v418
    %v990 = vunpack.c.l.b16 %v419
    %v991 = vunpack.c.h.b16 %v419
    %v992 = vunpack.c.l.b16 %v420
    %v993 = vunpack.c.h.b16 %v420
    %v994 = vunpack.c.l.b16 %v421
    %v995 = vunpack.c.h.b16 %v421
    %v996 = vunpack.c.l.b16 %v422
    %v997 = vunpack.c.h.b16 %v422
    %v998 = vunpack.c.l.b16 %v423
    %v999 = vunpack.c.h.b16 %v423
    %v1000 = vunpack.c.l.b16 %v424
    %v1001 = vunpack.c.h.b16 %v424
    %v1002 = vunpack.c.l.b16 %v425
    %v1003 = vunpack.c.h.b16 %v425
    %v1004 = vunpack.c.l.b16 %v426
    %v1005 = vunpack.c.h.b16 %v426
    %v1006 = vunpack.c.l.b16 %v427
    %v1007 = vunpack.c.h.b16 %v427
    %v1008 = vunpack.c.l.b16 %v428
    %v1009 = vunpack.c.h.b16 %v428
    %v1010 = vunpack.c.l.b16 %v429
    %v1011 = vunpack.c.h.b16 %v429
    %v1012 = vunpack.c.l.b16 %v430
    %v1013 = vunpack.c.h.b16 %v430
    %v1014 = vunpack.c.l.b16 %v431
    %v1015 = vunpack.c.h.b16 %v431
    %v1016 = vunpack.c.l.b16 %v432
    %v1017 = vunpack.c.h.b16 %v432
    %v1018 = vunpack.c.l.b16 %v433
    %v1019 = vunpack.c.h.b16 %v433
    %v1020 = vunpack.c.l.b16 %v434
    %v1021 = vunpack.c.h.b16 %v434
    %v1022 = vunpack.c.l.b16 %v435
    %v1023 = vunpack.c.h.b16 %v435
    %v1024 = vunpack.c.l.b16 %v436
    %v1025 = vunpack.c.h.b16 %v436
    %v1026 = vunpack.c.l.b16 %v437
    %v1027 = vunpack.c.h.b16 %v437
    %v1028 = vunpack.c.l.b16 %v438
    %v1029 = vunpack.c.h.b16 %v438
    %v1030 = vunpack.c.l.b16 %v439
    %v1031 = vunpack.c.h.b16 %v439
    %v1032 = vunpack.c.l.b16 %v440
    %v1033 = vunpack.c.h.b16 %v440
    %v1034 = vunpack.c.l.b16 %v441
    %v1035 = vunpack.c.h.b16 %v441
    %v1036 = vunpack.c.l.b16 %v442
    %v1037 = vunpack.c.h.b16 %v442
    %v1038 = vunpack.c.l.b16 %v443
    %v1039 = vunpack.c.h.b16 %v443
    %v1040 = vunpack.c.l.b16 %v444
    %v1041 = vunpack.c.h.b16 %v444
    %v1042 = vunpack.c.l.b16 %v445
    %v1043 = vunpack.c.h.b16 %v445
    %v1044 = vunpack.c.l.b16 %v446
    %v1045 = vunpack.c.h.b16 %v446
    %v1046 = vunpack.c.l.b16 %v447
    %v1047 = vunpack.c.h.b16 %v447
    %v1048 = vunpack.c.l.b16 %v448
    %v1049 = vunpack.c.h.b16 %v448
    %v1050 = vunpack.c.l.b16 %v449
    %v1051 = vunpack.c.h.b16 %v449
    %v1052 = vunpack.c.l.b16 %v450
    %v1053 = vunpack.c.h.b16 %v450
    %v1054 = vunpack.c.l.b16 %v451
    %v1055 = vunpack.c.h.b16 %v451
    %v1056 = vunpack.c.l.b16 %v452
    %v1057 = vunpack.c.h.b16 %v452
    %v1058 = vunpack.c.l.b16 %v453
    %v1059 = vunpack.c.h.b16 %v453
    %v1060 = vunpack.c.l.b16 %v454
    %v1061 = vunpack.c.h.b16 %v454
    %v1062 = vunpack.c.l.b16 %v455
    %v1063 = vunpack.c.h.b16 %v455
    %v1064 = vunpack.c.l.b16 %v456
    %v1065 = vunpack.c.h.b16 %v456
    %v1066 = vunpack.c.l.b16 %v457
    %v1067 = vunpack.c.h.b16 %v457
    %v1068 = vunpack.c.l.b16 %v458
    %v1069 = vunpack.c.h.b16 %v458
    %v1070 = vunpack.c.l.b16 %v459
    %v1071 = vunpack.c.h.b16 %v459
    %v1072 = vunpack.c.l.b16 %v460
    %v1073 = vunpack.c.h.b16 %v460
    %v1074 = vunpack.c.l.b16 %v461
    %v1075 = vunpack.c.h.b16 %v461
    %v1076 = vunpack.c.l.b16 %v462
    %v1077 = vunpack.c.h.b16 %v462
    %v1078 = vunpack.c.l.b16 %v463
    %v1079 = vunpack.c.h.b16 %v463
    %v1080 = vunpack.c.l.b16 %v464
    %v1081 = vunpack.c.h.b16 %v464
    %v1082 = vunpack.c.l.b16 %v465
    %v1083 = vunpack.c.h.b16 %v465
    %v1084 = vunpack.c.l.b16 %v466
    %v1085 = vunpack.c.h.b16 %v466
    %v1086 = vunpack.c.l.b16 %v467
    %v1087 = vunpack.c.h.b16 %v467
    %v1088 = vunpack.c.l.b16 %v468
    %v1089 = vunpack.c.h.b16 %v468
    %v1090 = vunpack.c.l.b16 %v469
    %v1091 = vunpack.c.h.b16 %v469
    %v1092 = vunpack.c.l.b16 %v470
    %v1093 = vunpack.c.h.b16 %v470
    %v1094 = vunpack.c.l.b16 %v471
    %v1095 = vunpack.c.h.b16 %v471
    %v1096 = vunpack.c.l.b16 %v472
    %v1097 = vunpack.c.h.b16 %v472
    %v1098 = vunpack.c.l.b16 %v473
    %v1099 = vunpack.c.h.b16 %v473
    %v1100 = vunpack.c.l.b16 %v474
    %v1101 = vunpack.c.h.b16 %v474
    %v1102 = vunpack.c.l.b16 %v475
    %v1103 = vunpack.c.h.b16 %v475
    %v1104 = vunpack.c.l.b16 %v476
    %v1105 = vunpack.c.h.b16 %v476
    %v1106 = vunpack.c.l.b16 %v477
    %v1107 = vunpack.c.h.b16 %v477
    %v1108 = vpack.c.b16 %v728, %v724
    %v1109 = vpack.c.b16 %v729, %v725
    %v1110 = vpack.c.b16 %v730, %v726
    %v1111 = vpack.c.b16 %v731, %v727
    %v1112 = vpack.c.b16 %v736, %v732
    %v1113 = vpack.c.b16 %v737, %v733
    %v1114 = vpack.c.b16 %v738, %v734
    %v1115 = vpack.c.b16 %v739, %v735
    %v1116 = vpack.c.b16 %v744, %v740
    %v1117 = vpack.c.b16 %v745, %v741
    %v1118 = vpack.c.b16 %v746, %v742
    %v1119 = vpack.c.b16 %v747, %v743
    %v1120 = vpack.c.b16 %v752, %v748
    %v1121 = vpack.c.b16 %v753, %v749
    %v1122 = vpack.c.b16 %v754, %v750
    %v1123 = vpack.c.b16 %v755, %v751
    %v1124 = vpack.c.b16 %v760, %v756
    %v1125 = vpack.c.b16 %v761, %v757
    %v1126 = vpack.c.b16 %v762, %v758
    %v1127 = vpack.c.b16 %v763, %v759
    %v1128 = vpack.c.b16 %v768, %v764
    %v1129 = vpack.c.b16 %v769, %v765
    %v1130 = vpack.c.b16 %v770, %v766
    %v1131 = vpack.c.b16 %v771, %v767
    %v1132 = vpack.c.b16 %v776, %v772
    %v1133 = vpack.c.b16 %v777, %v773
    %v1134 = vpack.c.b16 %v778, %v774
    %v1135 = vpack.c.b16 %v779, %v775
    %v1136 = vpack.c.b16 %v784, %v780
    %v1137 = vpack.c.b16 %v785, %v781
    %v1138 = vpack.c.b16 %v786, %v782
    %v1139 = vpack.c.b16 %v787, %v783
    %v1140 = vpack.c.b16 %v792, %v788
    %v1141 = vpack.c.b16 %v793, %v789
    %v1142 = vpack.c.b16 %v794, %v790
    %v1143 = vpack.c.b16 %v795, %v791
    %v1144 = vpack.c.b16 %v800, %v796
    %v1145 = vpack.c.b16 %v801, %v797
    %v1146 = vpack.c.b16 %v802, %v798
    %v1147 = vpack.c.b16 %v803, %v799
    %v1148 = vpack.c.b16 %v808, %v804
    %v1149 = vpack.c.b16 %v809, %v805
    %v1150 = vpack.c.b16 %v810, %v806
    %v1151 = vpack.c.b16 %v811, %v807
    %v1152 = vpack.c.b16 %v816, %v812
    %v1153 = vpack.c.b16 %v817, %v813
    %v1154 = vpack.c.b16 %v818, %v814
    %v1155 = vpack.c.b16 %v819, %v815
    %v1156 = vpack.c.b16 %v824, %v820
    %v1157 = vpack.c.b16 %v825, %v821
    %v1158 = vpack.c.b16 %v826, %v822
    %v1159 = vpack.c.b16 %v827, %v823
    %v1160 = vpack.c.b16 %v832, %v828
    %v1161 = vpack.c.b16 %v833, %v829
    %v1162 = vpack.c.b16 %v834, %v830
    %v1163 = vpack.c.b16 %v835, %v831
    %v1164 = vpack.c.b16 %v840, %v836
    %v1165 = vpack.c.b16 %v841, %v837
    %v1166 = vpack.c.b16 %v842, %v838
    %v1167 = vpack.c.b16 %v843, %v839
    %v1168 = vpack.c.b16 %v848, %v844
    %v1169 = vpack.c.b16 %v849, %v845
    %v1170 = vpack.c.b16 %v850, %v846
    %v1171 = vpack.c.b16 %v851, %v847
    %v1172 = vpack.c.b16 %v856, %v852
    %v1173 = vpack.c.b16 %v857, %v853
    %v1174 = vpack.c.b16 %v858, %v854
    %v1175 = vpack.c.b16 %v859, %v855
    %v1176 = vpack.c.b16 %v864, %v860
    %v1177 = vpack.c.b16 %v865, %v861
    %v1178 = vpack.c.b16 %v866, %v862
    %v1179 = vpack.c.b16 %v867, %v863
    %v1180 = vpack.c.b16 %v872, %v868
    %v1181 = vpack.c.b16 %v873, %v869
    %v1182 = vpack.c.b16 %v874, %v870
    %v1183 = vpack.c.b16 %v875, %v871
    %v1184 = vpack.c.b16 %v880, %v876
    %v1185 = vpack.c.b16 %v881, %v877
    %v1186 = vpack.c.b16 %v882, %v878
    %v1187 = vpack.c.b16 %v883, %v879
    %v1188 = vpack.c.b16 %v888, %v884
    %v1189 = vpack.c.b16 %v889, %v885
    %v1190 = vpack.c.b16 %v890, %v886
    %v1191 = vpack.c.b16 %v891, %v887
    %v1192 = vpack.c.b16 %v896, %v892
    %v1193 = vpack.c.b16 %v897, %v893
    %v1194 = vpack.c.b16 %v898, %v894
    %v1195 = vpack.c.b16 %v899, %v895
    %v1196 = vpack.c.b16 %v904, %v900
    %v1197 = vpack.c.b16 %v905, %v901
    %v1198 = vpack.c.b16 %v906, %v902
    %v1199 = vpack.c.b16 %v907, %v903
    %v1200 = vpack.c.b16 %v912, %v908
    %v1201 = vpack.c.b16 %v913, %v909
    %v1202 = vpack.c.b16 %v914, %v910
    %v1203 = vpack.c.b16 %v915, %v911
    %v1204 = vpack.c.b16 %v920, %v916
    %v1205 = vpack.c.b16 %v921, %v917
    %v1206 = vpack.c.b16 %v922, %v918
    %v1207 = vpack.c.b16 %v923, %v919
    %v1208 = vpack.c.b16 %v928, %v924
    %v1209 = vpack.c.b16 %v929, %v925
    %v1210 = vpack.c.b16 %v930, %v926
    %v1211 = vpack.c.b16 %v931, %v927
    %v1212 = vpack.c.b16 %v936, %v932
    %v1213 = vpack.c.b16 %v937, %v933
    %v1214 = vpack.c.b16 %v938, %v934
    %v1215 = vpack.c.b16 %v939, %v935
    %v1216 = vpack.c.b16 %v944, %v940
    %v1217 = vpack.c.b16 %v945, %v941
    %v1218 = vpack.c.b16 %v946, %v942
    %v1219 = vpack.c.b16 %v947, %v943
    %v1220 = vpack.c.b16 %v952, %v948
    %v1221 = vpack.c.b16 %v953, %v949
    %v1222 = vpack.c.b16 %v954, %v950
    %v1223 = vpack.c.b16 %v955, %v951
    %v1224 = vpack.c.b16 %v960, %v956
    %v1225 = vpack.c.b16 %v961, %v957
    %v1226 = vpack.c.b16 %v962, %v958
    %v1227 = vpack.c.b16 %v963, %v959
    %v1228 = vpack.c.b16 %v968, %v964
    %v1229 = vpack.c.b16 %v969, %v965
    %v1230 = vpack.c.b16 %v970, %v966
    %v1231 = vpack.c.b16 %v971, %v967
    %v1232 = vpack.c.b16 %v976, %v972
    %v1233 = vpack.c.b16 %v977, %v973
    %v1234 = vpack.c.b16 %v978, %v974
    %v1235 = vpack.c.b16 %v979, %v975
    %v1236 = vpack.c.b16 %v984, %v980
    %v1237 = vpack.c.b16 %v985, %v981
    %v1238 = vpack.c.b16 %v986, %v982
    %v1239 = vpack.c.b16 %v987, %v983
    %v1240 = vpack.c.b16 %v992, %v988
    %v1241 = vpack.c.b16 %v993, %v989
    %v1242 = vpack.c.b16 %v994, %v990
    %v1243 = vpack.c.b16 %v995, %v991
    %v1244 = vpack.c.b16 %v1000, %v996
    %v1245 = vpack.c.b16 %v1001, %v997
    %v1246 = vpack.c.b16 %v1002, %v998
    %v1247 = vpack.c.b16 %v1003, %v999
    %v1248 = vpack.c.b16 %v1008, %v1004
    %v1249 = vpack.c.b16 %v1009, %v1005
    %v1250 = vpack.c.b16 %v1010, %v1006
    %v1251 = vpack.c.b16 %v1011, %v1007
    %v1252 = vpack.c.b16 %v1016, %v1012
    %v1253 = vpack.c.b16 %v1017, %v1013
    %v1254 = vpack.c.b16 %v1018, %v1014
    %v1255 = vpack.c.b16 %v1019, %v1015
    %v1256 = vpack.c.b16 %v1024, %v1020
    %v1257 = vpack.c.b16 %v1025, %v1021
    %v1258 = vpack.c.b16 %v1026, %v1022
    %v1259 = vpack.c.b16 %v1027, %v1023
    %v1260 = vpack.c.b16 %v1032, %v1028
    %v1261 = vpack.c.b16 %v1033, %v1029
    %v1262 = vpack.c.b16 %v1034, %v1030
    %v1263 = vpack.c.b16 %v1035, %v1031
    %v1264 = vpack.c.b16 %v1040, %v1036
    %v1265 = vpack.c.b16 %v1041, %v1037
    %v1266 = vpack.c.b16 %v1042, %v1038
    %v1267 = vpack.c.b16 %v1043, %v1039
    %v1268 = vpack.c.b16 %v1048, %v1044
    %v1269 = vpack.c.b16 %v1049, %v1045
    %v1270 = vpack.c.b16 %v1050, %v1046
    %v1271 = vpack.c.b16 %v1051, %v1047
    %v1272 = vpack.c.b16 %v1056, %v1052
    %v1273 = vpack.c.b16 %v1057, %v1053
    %v1274 = vpack.c.b16 %v1058, %v1054
    %v1275 = vpack.c.b16 %v1059, %v1055
    %v1276 = vpack.c.b16 %v1064, %v1060
    %v1277 = vpack.c.b16 %v1065, %v1061
    %v1278 = vpack.c.b16 %v1066, %v1062
    %v1279 = vpack.c.b16 %v1067, %v1063
    %v1280 = vpack.c.b16 %v1072, %v1068
    %v1281 = vpack.c.b16 %v1073, %v1069
    %v1282 = vpack.c.b16 %v1074, %v1070
    %v1283 = vpack.c.b16 %v1075, %v1071
    %v1284 = vpack.c.b16 %v1080, %v1076
    %v1285 = vpack.c.b16 %v1081, %v1077
    %v1286 = vpack.c.b16 %v1082, %v1078
    %v1287 = vpack.c.b16 %v1083, %v1079
    %v1288 = vpack.c.b16 %v1088, %v1084
    %v1289 = vpack.c.b16 %v1089, %v1085
    %v1290 = vpack.c.b16 %v1090, %v1086
    %v1291 = vpack.c.b16 %v1091, %v1087
    %v1292 = vpack.c.b16 %v1096, %v1092
    %v1293 = vpack.c.b16 %v1097, %v1093
    %v1294 = vpack.c.b16 %v1098, %v1094
    %v1295 = vpack.c.b16 %v1099, %v1095
    %v1296 = vpack.c.b16 %v1104, %v1100
    %v1297 = vpack.c.b16 %v1105, %v1101
    %v1298 = vpack.c.b16 %v1106, %v1102
    %v1299 = vpack.c.b16 %v1107, %v1103
    %1492 = vmatprep.subr.bf16.mxu0 %v1109
    %1493 = vmatpush1.bf16.msra.mxu0 %v1108
    %1494 = vmatprep.subr.bf16.mxu0 %v1113
    %1495 = vmatpush1.bf16.msra.mxu0 %v1112
    %1496 = vmatprep.subr.bf16.mxu0 %v1117
    %1497 = vmatpush1.bf16.msra.mxu0 %v1116
    %1498 = vmatprep.subr.bf16.mxu0 %v1121
    %1499 = vmatpush1.bf16.msra.mxu0 %v1120
    %1500 = vmatprep.subr.bf16.mxu0 %v1125
    %1501 = vmatpush1.bf16.msra.mxu0 %v1124
    %1502 = vmatprep.subr.bf16.mxu0 %v1129
    %1503 = vmatpush1.bf16.msra.mxu0 %v1128
    %1504 = vmatprep.subr.bf16.mxu0 %v1133
    %1505 = vmatpush1.bf16.msra.mxu0 %v1132
    %1506 = vmatprep.subr.bf16.mxu0 %v1137
    %1507 = vmatpush1.bf16.msra.mxu0 %v1136
    %1508 = vmatprep.subr.bf16.mxu0 %v1141
    %1509 = vmatpush1.bf16.msra.mxu0 %v1140
    %1510 = vmatprep.subr.bf16.mxu0 %v1145
    %1511 = vmatpush1.bf16.msra.mxu0 %v1144
    %1512 = vmatprep.subr.bf16.mxu0 %v1149
    %1513 = vmatpush1.bf16.msra.mxu0 %v1148
    %1514 = vmatprep.subr.bf16.mxu0 %v1153
    %1515 = vmatpush1.bf16.msra.mxu0 %v1152
    %1516 = vmatprep.subr.bf16.mxu0 %v1157
    %1517 = vmatpush1.bf16.msra.mxu0 %v1156
    %1518 = vmatprep.subr.bf16.mxu0 %v1161
    %1519 = vmatpush1.bf16.msra.mxu0 %v1160
    %1520 = vmatprep.subr.bf16.mxu0 %v1165
    %1521 = vmatpush1.bf16.msra.mxu0 %v1164
    %1522 = vmatprep.subr.bf16.mxu0 %v1169
    %1523 = vmatpush1.bf16.msra.mxu0 %v1168
    %1524 = vmatprep.mubr.bf16.mxu0 %v516
    %1525 = vmatmul.mubr.bf16.gmra.mrb[0].mxu0 %v502
    %v1526 = vpop.f32.mrb[0].mxu0
    %v1527 = vadd.f32 0.0, %v1526
    %v1528 = vpop.f32.mrb[0].mxu0
    %v1529 = vadd.f32 0.0, %v1528
    %v1530 = vpop.f32.mrb[0].mxu0
    %v1531 = vpop.f32.mrb[0].mxu0
    %1532 = vdwg.mxu0
    %1533 = vmatprep.subr.bf16.mxu0 %v1173
    %1534 = vmatpush1.bf16.msra.mxu0 %v1172
    %1535 = vmatprep.subr.bf16.mxu0 %v1177
    %1536 = vmatpush1.bf16.msra.mxu0 %v1176
    %1537 = vmatprep.subr.bf16.mxu0 %v1181
    %1538 = vmatpush1.bf16.msra.mxu0 %v1180
    %1539 = vmatprep.subr.bf16.mxu0 %v1185
    %1540 = vmatpush1.bf16.msra.mxu0 %v1184
    %1541 = vmatprep.subr.bf16.mxu0 %v1189
    %1542 = vmatpush1.bf16.msra.mxu0 %v1188
    %1543 = vmatprep.subr.bf16.mxu0 %v1193
    %1544 = vmatpush1.bf16.msra.mxu0 %v1192
    %1545 = vmatprep.subr.bf16.mxu0 %v1197
    %1546 = vmatpush1.bf16.msra.mxu0 %v1196
    %1547 = vmatprep.subr.bf16.mxu0 %v1201
    %1548 = vmatpush1.bf16.msra.mxu0 %v1200
    %1549 = vmatprep.subr.bf16.mxu0 %v1205
    %1550 = vmatpush1.bf16.msra.mxu0 %v1204
    %1551 = vmatprep.subr.bf16.mxu0 %v1209
    %1552 = vmatpush1.bf16.msra.mxu0 %v1208
    %1553 = vmatprep.subr.bf16.mxu0 %v1213
    %1554 = vmatpush1.bf16.msra.mxu0 %v1212
    %1555 = vmatprep.subr.bf16.mxu0 %v1217
    %1556 = vmatpush1.bf16.msra.mxu0 %v1216
    %1557 = vmatprep.subr.bf16.mxu0 %v1221
    %1558 = vmatpush1.bf16.msra.mxu0 %v1220
    %1559 = vmatprep.subr.bf16.mxu0 %v1225
    %1560 = vmatpush1.bf16.msra.mxu0 %v1224
    %1561 = vmatprep.subr.bf16.mxu0 %v1229
    %1562 = vmatpush1.bf16.msra.mxu0 %v1228
    %1563 = vmatprep.subr.bf16.mxu0 %v1233
    %1564 = vmatpush1.bf16.msra.mxu0 %v1232
    %1565 = vmatprep.mubr.bf16.mxu0 %v525
    %1566 = vmatmul.mubr.bf16.gmra.mrb[0].mxu0 %v524
    %v1567 = vpop.f32.mrb[0].mxu0
    %v1568 = vadd.f32 %v1527, %v1567
    %v1569 = vpop.f32.mrb[0].mxu0
    %v1570 = vadd.f32 %v1529, %v1569
    %v1571 = vpop.f32.mrb[0].mxu0
    %v1572 = vpop.f32.mrb[0].mxu0
    %1573 = vdwg.mxu0
    %1574 = vmatprep.subr.bf16.mxu0 %v1237
    %1575 = vmatpush1.bf16.msra.mxu0 %v1236
    %1576 = vmatprep.subr.bf16.mxu0 %v1241
    %1577 = vmatpush1.bf16.msra.mxu0 %v1240
    %1578 = vmatprep.subr.bf16.mxu0 %v1245
    %1579 = vmatpush1.bf16.msra.mxu0 %v1244
    %1580 = vmatprep.subr.bf16.mxu0 %v1249
    %1581 = vmatpush1.bf16.msra.mxu0 %v1248
    %1582 = vmatprep.subr.bf16.mxu0 %v1253
    %1583 = vmatpush1.bf16.msra.mxu0 %v1252
    %1584 = vmatprep.subr.bf16.mxu0 %v1257
    %1585 = vmatpush1.bf16.msra.mxu0 %v1256
    %1586 = vmatprep.subr.bf16.mxu0 %v1261
    %1587 = vmatpush1.bf16.msra.mxu0 %v1260
    %1588 = vmatprep.subr.bf16.mxu0 %v1265
    %1589 = vmatpush1.bf16.msra.mxu0 %v1264
    %1590 = vmatprep.subr.bf16.mxu0 %v1269
    %1591 = vmatpush1.bf16.msra.mxu0 %v1268
    %1592 = vmatprep.subr.bf16.mxu0 %v1273
    %1593 = vmatpush1.bf16.msra.mxu0 %v1272
    %1594 = vmatprep.subr.bf16.mxu0 %v1277
    %1595 = vmatpush1.bf16.msra.mxu0 %v1276
    %1596 = vmatprep.subr.bf16.mxu0 %v1281
    %1597 = vmatpush1.bf16.msra.mxu0 %v1280
    %1598 = vmatprep.subr.bf16.mxu0 %v1285
    %1599 = vmatpush1.bf16.msra.mxu0 %v1284
    %1600 = vmatprep.subr.bf16.mxu0 %v1289
    %1601 = vmatpush1.bf16.msra.mxu0 %v1288
    %1602 = vmatprep.subr.bf16.mxu0 %v1293
    %1603 = vmatpush1.bf16.msra.mxu0 %v1292
    %1604 = vmatprep.subr.bf16.mxu0 %v1297
    %1605 = vmatpush1.bf16.msra.mxu0 %v1296
    %1606 = vmatprep.mubr.bf16.mxu0 %v523
    %1607 = vmatmul.mubr.bf16.gmra.mrb[0].mxu0 %v509
    %v1608 = vpop.f32.mrb[0].mxu0
    %v1609 = vadd.f32 %v1568, %v1608
    %v1610 = vpop.f32.mrb[0].mxu0
    %v1611 = vadd.f32 %v1570, %v1610
    %v1612 = vpop.f32.mrb[0].mxu0
    %v1613 = vpop.f32.mrb[0].mxu0
    %1614 = vdwg.mxu0
    %1615 = vmatprep.subr.bf16.mxu0 %v1111
    %1616 = vmatpush1.bf16.msra.mxu0 %v1110
    %1617 = vmatprep.subr.bf16.mxu0 %v1115
    %1618 = vmatpush1.bf16.msra.mxu0 %v1114
    %1619 = vmatprep.subr.bf16.mxu0 %v1119
    %1620 = vmatpush1.bf16.msra.mxu0 %v1118
    %1621 = vmatprep.subr.bf16.mxu0 %v1123
    %1622 = vmatpush1.bf16.msra.mxu0 %v1122
    %1623 = vmatprep.subr.bf16.mxu0 %v1127
    %1624 = vmatpush1.bf16.msra.mxu0 %v1126
    %1625 = vmatprep.subr.bf16.mxu0 %v1131
    %1626 = vmatpush1.bf16.msra.mxu0 %v1130
    %1627 = vmatprep.subr.bf16.mxu0 %v1135
    %1628 = vmatpush1.bf16.msra.mxu0 %v1134
    %1629 = vmatprep.subr.bf16.mxu0 %v1139
    %1630 = vmatpush1.bf16.msra.mxu0 %v1138
    %1631 = vmatprep.subr.bf16.mxu0 %v1143
    %1632 = vmatpush1.bf16.msra.mxu0 %v1142
    %1633 = vmatprep.subr.bf16.mxu0 %v1147
    %1634 = vmatpush1.bf16.msra.mxu0 %v1146
    %1635 = vmatprep.subr.bf16.mxu0 %v1151
    %1636 = vmatpush1.bf16.msra.mxu0 %v1150
    %1637 = vmatprep.subr.bf16.mxu0 %v1155
    %1638 = vmatpush1.bf16.msra.mxu0 %v1154
    %1639 = vmatprep.subr.bf16.mxu0 %v1159
    %1640 = vmatpush1.bf16.msra.mxu0 %v1158
    %1641 = vmatprep.subr.bf16.mxu0 %v1163
    %1642 = vmatpush1.bf16.msra.mxu0 %v1162
    %1643 = vmatprep.subr.bf16.mxu0 %v1167
    %1644 = vmatpush1.bf16.msra.mxu0 %v1166
    %1645 = vmatprep.subr.bf16.mxu0 %v1171
    %1646 = vmatpush1.bf16.msra.mxu0 %v1170
    %1647 = vmatprep.mubr.bf16.mxu0 %v516
    %1648 = vmatmul.mubr.bf16.gmra.mrb[0].mxu0 %v502
    %v1649 = vpop.f32.mrb[0].mxu0
    %v1650 = vadd.f32 0.0, %v1649
    %v1651 = vpop.f32.mrb[0].mxu0
    %v1652 = vadd.f32 0.0, %v1651
    %v1653 = vpop.f32.mrb[0].mxu0
    %v1654 = vpop.f32.mrb[0].mxu0
    %1655 = vdwg.mxu0
    %1656 = vmatprep.subr.bf16.mxu0 %v1175
    %1657 = vmatpush1.bf16.msra.mxu0 %v1174
    %1658 = vmatprep.subr.bf16.mxu0 %v1179
    %1659 = vmatpush1.bf16.msra.mxu0 %v1178
    %1660 = vmatprep.subr.bf16.mxu0 %v1183
    %1661 = vmatpush1.bf16.msra.mxu0 %v1182
    %1662 = vmatprep.subr.bf16.mxu0 %v1187
    %1663 = vmatpush1.bf16.msra.mxu0 %v1186
    %1664 = vmatprep.subr.bf16.mxu0 %v1191
    %1665 = vmatpush1.bf16.msra.mxu0 %v1190
    %1666 = vmatprep.subr.bf16.mxu0 %v1195
    %1667 = vmatpush1.bf16.msra.mxu0 %v1194
    %1668 = vmatprep.subr.bf16.mxu0 %v1199
    %1669 = vmatpush1.bf16.msra.mxu0 %v1198
    %1670 = vmatprep.subr.bf16.mxu0 %v1203
    %1671 = vmatpush1.bf16.msra.mxu0 %v1202
    %1672 = vmatprep.subr.bf16.mxu0 %v1207
    %1673 = vmatpush1.bf16.msra.mxu0 %v1206
    %1674 = vmatprep.subr.bf16.mxu0 %v1211
    %1675 = vmatpush1.bf16.msra.mxu0 %v1210
    %1676 = vmatprep.subr.bf16.mxu0 %v1215
    %1677 = vmatpush1.bf16.msra.mxu0 %v1214
    %1678 = vmatprep.subr.bf16.mxu0 %v1219
    %1679 = vmatpush1.bf16.msra.mxu0 %v1218
    %1680 = vmatprep.subr.bf16.mxu0 %v1223
    %1681 = vmatpush1.bf16.msra.mxu0 %v1222
    %1682 = vmatprep.subr.bf16.mxu0 %v1227
    %1683 = vmatpush1.bf16.msra.mxu0 %v1226
    %1684 = vmatprep.subr.bf16.mxu0 %v1231
    %1685 = vmatpush1.bf16.msra.mxu0 %v1230
    %1686 = vmatprep.subr.bf16.mxu0 %v1235
    %1687 = vmatpush1.bf16.msra.mxu0 %v1234
    %1688 = vmatprep.mubr.bf16.mxu0 %v525
    %1689 = vmatmul.mubr.bf16.gmra.mrb[0].mxu0 %v524
    %v1690 = vpop.f32.mrb[0].mxu0
    %v1691 = vadd.f32 %v1650, %v1690
    %v1692 = vpop.f32.mrb[0].mxu0
    %v1693 = vadd.f32 %v1652, %v1692
    %v1694 = vpop.f32.mrb[0].mxu0
    %v1695 = vpop.f32.mrb[0].mxu0
    %1696 = vdwg.mxu0
    %1697 = vmatprep.subr.bf16.mxu0 %v1239
    %1698 = vmatpush1.bf16.msra.mxu0 %v1238
    %1699 = vmatprep.subr.bf16.mxu0 %v1243
    %1700 = vmatpush1.bf16.msra.mxu0 %v1242
    %1701 = vmatprep.subr.bf16.mxu0 %v1247
    %1702 = vmatpush1.bf16.msra.mxu0 %v1246
    %1703 = vmatprep.subr.bf16.mxu0 %v1251
    %1704 = vmatpush1.bf16.msra.mxu0 %v1250
    %1705 = vmatprep.subr.bf16.mxu0 %v1255
    %1706 = vmatpush1.bf16.msra.mxu0 %v1254
    %1707 = vmatprep.subr.bf16.mxu0 %v1259
    %1708 = vmatpush1.bf16.msra.mxu0 %v1258
    %1709 = vmatprep.subr.bf16.mxu0 %v1263
    %1710 = vmatpush1.bf16.msra.mxu0 %v1262
    %1711 = vmatprep.subr.bf16.mxu0 %v1267
    %1712 = vmatpush1.bf16.msra.mxu0 %v1266
    %1713 = vmatprep.subr.bf16.mxu0 %v1271
    %1714 = vmatpush1.bf16.msra.mxu0 %v1270
    %1715 = vmatprep.subr.bf16.mxu0 %v1275
    %1716 = vmatpush1.bf16.msra.mxu0 %v1274
    %1717 = vmatprep.subr.bf16.mxu0 %v1279
    %1718 = vmatpush1.bf16.msra.mxu0 %v1278
    %1719 = vmatprep.subr.bf16.mxu0 %v1283
    %1720 = vmatpush1.bf16.msra.mxu0 %v1282
    %1721 = vmatprep.subr.bf16.mxu0 %v1287
    %1722 = vmatpush1.bf16.msra.mxu0 %v1286
    %1723 = vmatprep.subr.bf16.mxu0 %v1291
    %1724 = vmatpush1.bf16.msra.mxu0 %v1290
    %1725 = vmatprep.subr.bf16.mxu0 %v1295
    %1726 = vmatpush1.bf16.msra.mxu0 %v1294
    %1727 = vmatprep.subr.bf16.mxu0 %v1299
    %1728 = vmatpush1.bf16.msra.mxu0 %v1298
    %1729 = vmatprep.mubr.bf16.mxu0 %v523
    %1730 = vmatmul.mubr.bf16.gmra.mrb[0].mxu0 %v509
    %v1731 = vpop.f32.mrb[0].mxu0
    %v1732 = vadd.f32 %v1691, %v1731
    %v1733 = vpop.f32.mrb[0].mxu0
    %v1734 = vadd.f32 %v1693, %v1733
    %v1735 = vpop.f32.mrb[0].mxu0
    %v1736 = vpop.f32.mrb[0].mxu0
    %1737 = vdwg.mxu0
    %v1739 = vcombine.high %v92, %v92
    %v1741 = vunpack.c.l.s4 1966171168
    %v1742 = vunpack.c.0.s8 %v1741
    %v1743 = vlaneseq
    %v1744 = vshrl.u32 %v1743, 7
    %v1745 = vsub.s32 %v1742, %v1744
    %v1746 = vrot.slane %v92, %v1745
    %v1748 = vunpack.c.l.s4 1966171168
    %v1749 = vunpack.c.0.s8 %v1748
    %v1750 = vlaneseq
    %v1751 = vshrl.u32 %v1750, 7
    %v1752 = vsub.s32 %v1749, %v1751
    %v1753 = vrot.slane %v1739, %v1752
    %v1754 = vcombine.high %v1746, %v1746
    %v1755 = vcombine.high %v1753, %v1753
    %v1757 = vunpack.c.l.s4 1966171168
    %v1758 = vunpack.c.0.s8 %v1757
    %v1759 = vlaneseq
    %v1760 = vshrl.u32 %v1759, 7
    %v1761 = vsub.s32 %v1758, %v1760
    %v1762 = vrot.slane %v1746, %v1761
    %v1764 = vunpack.c.l.s4 1966171168
    %v1765 = vunpack.c.0.s8 %v1764
    %v1766 = vlaneseq
    %v1767 = vshrl.u32 %v1766, 7
    %v1768 = vsub.s32 %v1765, %v1767
    %v1769 = vrot.slane %v1753, %v1768
    %v1771 = vunpack.c.l.s4 1966171168
    %v1772 = vunpack.c.0.s8 %v1771
    %v1773 = vlaneseq
    %v1774 = vshrl.u32 %v1773, 7
    %v1775 = vsub.s32 %v1772, %v1774
    %v1776 = vrot.slane %v1754, %v1775
    %v1778 = vunpack.c.l.s4 1966171168
    %v1779 = vunpack.c.0.s8 %v1778
    %v1780 = vlaneseq
    %v1781 = vshrl.u32 %v1780, 7
    %v1782 = vsub.s32 %v1779, %v1781
    %v1783 = vrot.slane %v1755, %v1782
    %v1784 = vcombine.high %v1762, %v1762
    %v1785 = vcombine.high %v1776, %v1776
    %v1984 = vunpack.c.l.b16 %v93
    %v1985 = vunpack.c.h.b16 %v93
    %v1986 = vunpack.c.l.b16 %v94
    %v1987 = vunpack.c.h.b16 %v94
    %v1988 = vunpack.c.l.b16 %v95
    %v1989 = vunpack.c.h.b16 %v95
    %v1990 = vunpack.c.l.b16 %v96
    %v1991 = vunpack.c.h.b16 %v96
    %v1992 = vunpack.c.l.b16 %v97
    %v1993 = vunpack.c.h.b16 %v97
    %v1994 = vunpack.c.l.b16 %v98
    %v1995 = vunpack.c.h.b16 %v98
    %v1996 = vunpack.c.l.b16 %v99
    %v1997 = vunpack.c.h.b16 %v99
    %v1998 = vunpack.c.l.b16 %v100
    %v1999 = vunpack.c.h.b16 %v100
    %v2000 = vunpack.c.l.b16 %v101
    %v2001 = vunpack.c.h.b16 %v101
    %v2002 = vunpack.c.l.b16 %v102
    %v2003 = vunpack.c.h.b16 %v102
    %v2004 = vunpack.c.l.b16 %v103
    %v2005 = vunpack.c.h.b16 %v103
    %v2006 = vunpack.c.l.b16 %v104
    %v2007 = vunpack.c.h.b16 %v104
    %v2008 = vunpack.c.l.b16 %v105
    %v2009 = vunpack.c.h.b16 %v105
    %v2010 = vunpack.c.l.b16 %v106
    %v2011 = vunpack.c.h.b16 %v106
    %v2012 = vunpack.c.l.b16 %v107
    %v2013 = vunpack.c.h.b16 %v107
    %v2014 = vunpack.c.l.b16 %v108
    %v2015 = vunpack.c.h.b16 %v108
    %v2016 = vunpack.c.l.b16 %v109
    %v2017 = vunpack.c.h.b16 %v109
    %v2018 = vunpack.c.l.b16 %v110
    %v2019 = vunpack.c.h.b16 %v110
    %v2020 = vunpack.c.l.b16 %v111
    %v2021 = vunpack.c.h.b16 %v111
    %v2022 = vunpack.c.l.b16 %v112
    %v2023 = vunpack.c.h.b16 %v112
    %v2024 = vunpack.c.l.b16 %v113
    %v2025 = vunpack.c.h.b16 %v113
    %v2026 = vunpack.c.l.b16 %v114
    %v2027 = vunpack.c.h.b16 %v114
    %v2028 = vunpack.c.l.b16 %v115
    %v2029 = vunpack.c.h.b16 %v115
    %v2030 = vunpack.c.l.b16 %v116
    %v2031 = vunpack.c.h.b16 %v116
    %v2032 = vunpack.c.l.b16 %v117
    %v2033 = vunpack.c.h.b16 %v117
    %v2034 = vunpack.c.l.b16 %v118
    %v2035 = vunpack.c.h.b16 %v118
    %v2036 = vunpack.c.l.b16 %v119
    %v2037 = vunpack.c.h.b16 %v119
    %v2038 = vunpack.c.l.b16 %v120
    %v2039 = vunpack.c.h.b16 %v120
    %v2040 = vunpack.c.l.b16 %v121
    %v2041 = vunpack.c.h.b16 %v121
    %v2042 = vunpack.c.l.b16 %v122
    %v2043 = vunpack.c.h.b16 %v122
    %v2044 = vunpack.c.l.b16 %v123
    %v2045 = vunpack.c.h.b16 %v123
    %v2046 = vunpack.c.l.b16 %v124
    %v2047 = vunpack.c.h.b16 %v124
    %v2048 = vunpack.c.l.b16 %v125
    %v2049 = vunpack.c.h.b16 %v125
    %v2050 = vunpack.c.l.b16 %v126
    %v2051 = vunpack.c.h.b16 %v126
    %v2052 = vunpack.c.l.b16 %v127
    %v2053 = vunpack.c.h.b16 %v127
    %v2054 = vunpack.c.l.b16 %v128
    %v2055 = vunpack.c.h.b16 %v128
    %v2056 = vunpack.c.l.b16 %v129
    %v2057 = vunpack.c.h.b16 %v129
    %v2058 = vunpack.c.l.b16 %v130
    %v2059 = vunpack.c.h.b16 %v130
    %v2060 = vunpack.c.l.b16 %v131
    %v2061 = vunpack.c.h.b16 %v131
    %v2062 = vunpack.c.l.b16 %v132
    %v2063 = vunpack.c.h.b16 %v132
    %v2064 = vunpack.c.l.b16 %v133
    %v2065 = vunpack.c.h.b16 %v133
    %v2066 = vunpack.c.l.b16 %v134
    %v2067 = vunpack.c.h.b16 %v134
    %v2068 = vunpack.c.l.b16 %v135
    %v2069 = vunpack.c.h.b16 %v135
    %v2070 = vunpack.c.l.b16 %v136
    %v2071 = vunpack.c.h.b16 %v136
    %v2072 = vunpack.c.l.b16 %v137
    %v2073 = vunpack.c.h.b16 %v137
    %v2074 = vunpack.c.l.b16 %v138
    %v2075 = vunpack.c.h.b16 %v138
    %v2076 = vunpack.c.l.b16 %v139
    %v2077 = vunpack.c.h.b16 %v139
    %v2078 = vunpack.c.l.b16 %v140
    %v2079 = vunpack.c.h.b16 %v140
    %v2080 = vunpack.c.l.b16 %v141
    %v2081 = vunpack.c.h.b16 %v141
    %v2082 = vunpack.c.l.b16 %v142
    %v2083 = vunpack.c.h.b16 %v142
    %v2084 = vunpack.c.l.b16 %v143
    %v2085 = vunpack.c.h.b16 %v143
    %v2086 = vunpack.c.l.b16 %v144
    %v2087 = vunpack.c.h.b16 %v144
    %v2088 = vunpack.c.l.b16 %v145
    %v2089 = vunpack.c.h.b16 %v145
    %v2090 = vunpack.c.l.b16 %v146
    %v2091 = vunpack.c.h.b16 %v146
    %v2092 = vunpack.c.l.b16 %v147
    %v2093 = vunpack.c.h.b16 %v147
    %v2094 = vunpack.c.l.b16 %v148
    %v2095 = vunpack.c.h.b16 %v148
    %v2096 = vunpack.c.l.b16 %v149
    %v2097 = vunpack.c.h.b16 %v149
    %v2098 = vunpack.c.l.b16 %v150
    %v2099 = vunpack.c.h.b16 %v150
    %v2100 = vunpack.c.l.b16 %v151
    %v2101 = vunpack.c.h.b16 %v151
    %v2102 = vunpack.c.l.b16 %v152
    %v2103 = vunpack.c.h.b16 %v152
    %v2104 = vunpack.c.l.b16 %v153
    %v2105 = vunpack.c.h.b16 %v153
    %v2106 = vunpack.c.l.b16 %v154
    %v2107 = vunpack.c.h.b16 %v154
    %v2108 = vunpack.c.l.b16 %v155
    %v2109 = vunpack.c.h.b16 %v155
    %v2110 = vunpack.c.l.b16 %v156
    %v2111 = vunpack.c.h.b16 %v156
    %v2112 = vunpack.c.l.b16 %v157
    %v2113 = vunpack.c.h.b16 %v157
    %v2114 = vunpack.c.l.b16 %v158
    %v2115 = vunpack.c.h.b16 %v158
    %v2116 = vunpack.c.l.b16 %v159
    %v2117 = vunpack.c.h.b16 %v159
    %v2118 = vunpack.c.l.b16 %v160
    %v2119 = vunpack.c.h.b16 %v160
    %v2120 = vunpack.c.l.b16 %v161
    %v2121 = vunpack.c.h.b16 %v161
    %v2122 = vunpack.c.l.b16 %v162
    %v2123 = vunpack.c.h.b16 %v162
    %v2124 = vunpack.c.l.b16 %v163
    %v2125 = vunpack.c.h.b16 %v163
    %v2126 = vunpack.c.l.b16 %v164
    %v2127 = vunpack.c.h.b16 %v164
    %v2128 = vunpack.c.l.b16 %v165
    %v2129 = vunpack.c.h.b16 %v165
    %v2130 = vunpack.c.l.b16 %v166
    %v2131 = vunpack.c.h.b16 %v166
    %v2132 = vunpack.c.l.b16 %v167
    %v2133 = vunpack.c.h.b16 %v167
    %v2134 = vunpack.c.l.b16 %v168
    %v2135 = vunpack.c.h.b16 %v168
    %v2136 = vunpack.c.l.b16 %v169
    %v2137 = vunpack.c.h.b16 %v169
    %v2138 = vunpack.c.l.b16 %v170
    %v2139 = vunpack.c.h.b16 %v170
    %v2140 = vunpack.c.l.b16 %v171
    %v2141 = vunpack.c.h.b16 %v171
    %v2142 = vunpack.c.l.b16 %v172
    %v2143 = vunpack.c.h.b16 %v172
    %v2144 = vunpack.c.l.b16 %v173
    %v2145 = vunpack.c.h.b16 %v173
    %v2146 = vunpack.c.l.b16 %v174
    %v2147 = vunpack.c.h.b16 %v174
    %v2148 = vunpack.c.l.b16 %v175
    %v2149 = vunpack.c.h.b16 %v175
    %v2150 = vunpack.c.l.b16 %v176
    %v2151 = vunpack.c.h.b16 %v176
    %v2152 = vunpack.c.l.b16 %v177
    %v2153 = vunpack.c.h.b16 %v177
    %v2154 = vunpack.c.l.b16 %v178
    %v2155 = vunpack.c.h.b16 %v178
    %v2156 = vunpack.c.l.b16 %v179
    %v2157 = vunpack.c.h.b16 %v179
    %v2158 = vunpack.c.l.b16 %v180
    %v2159 = vunpack.c.h.b16 %v180
    %v2160 = vunpack.c.l.b16 %v181
    %v2161 = vunpack.c.h.b16 %v181
    %v2162 = vunpack.c.l.b16 %v182
    %v2163 = vunpack.c.h.b16 %v182
    %v2164 = vunpack.c.l.b16 %v183
    %v2165 = vunpack.c.h.b16 %v183
    %v2166 = vunpack.c.l.b16 %v184
    %v2167 = vunpack.c.h.b16 %v184
    %v2168 = vunpack.c.l.b16 %v185
    %v2169 = vunpack.c.h.b16 %v185
    %v2170 = vunpack.c.l.b16 %v186
    %v2171 = vunpack.c.h.b16 %v186
    %v2172 = vunpack.c.l.b16 %v187
    %v2173 = vunpack.c.h.b16 %v187
    %v2174 = vunpack.c.l.b16 %v188
    %v2175 = vunpack.c.h.b16 %v188
    %v2176 = vunpack.c.l.b16 %v189
    %v2177 = vunpack.c.h.b16 %v189
    %v2178 = vunpack.c.l.b16 %v190
    %v2179 = vunpack.c.h.b16 %v190
    %v2180 = vunpack.c.l.b16 %v191
    %v2181 = vunpack.c.h.b16 %v191
    %v2182 = vunpack.c.l.b16 %v192
    %v2183 = vunpack.c.h.b16 %v192
    %v2184 = vunpack.c.l.b16 %v193
    %v2185 = vunpack.c.h.b16 %v193
    %v2186 = vunpack.c.l.b16 %v194
    %v2187 = vunpack.c.h.b16 %v194
    %v2188 = vunpack.c.l.b16 %v195
    %v2189 = vunpack.c.h.b16 %v195
    %v2190 = vunpack.c.l.b16 %v196
    %v2191 = vunpack.c.h.b16 %v196
    %v2192 = vunpack.c.l.b16 %v197
    %v2193 = vunpack.c.h.b16 %v197
    %v2194 = vunpack.c.l.b16 %v198
    %v2195 = vunpack.c.h.b16 %v198
    %v2196 = vunpack.c.l.b16 %v199
    %v2197 = vunpack.c.h.b16 %v199
    %v2198 = vunpack.c.l.b16 %v200
    %v2199 = vunpack.c.h.b16 %v200
    %v2200 = vunpack.c.l.b16 %v201
    %v2201 = vunpack.c.h.b16 %v201
    %v2202 = vunpack.c.l.b16 %v202
    %v2203 = vunpack.c.h.b16 %v202
    %v2204 = vunpack.c.l.b16 %v203
    %v2205 = vunpack.c.h.b16 %v203
    %v2206 = vunpack.c.l.b16 %v204
    %v2207 = vunpack.c.h.b16 %v204
    %v2208 = vunpack.c.l.b16 %v205
    %v2209 = vunpack.c.h.b16 %v205
    %v2210 = vunpack.c.l.b16 %v206
    %v2211 = vunpack.c.h.b16 %v206
    %v2212 = vunpack.c.l.b16 %v207
    %v2213 = vunpack.c.h.b16 %v207
    %v2214 = vunpack.c.l.b16 %v208
    %v2215 = vunpack.c.h.b16 %v208
    %v2216 = vunpack.c.l.b16 %v209
    %v2217 = vunpack.c.h.b16 %v209
    %v2218 = vunpack.c.l.b16 %v210
    %v2219 = vunpack.c.h.b16 %v210
    %v2220 = vunpack.c.l.b16 %v211
    %v2221 = vunpack.c.h.b16 %v211
    %v2222 = vunpack.c.l.b16 %v212
    %v2223 = vunpack.c.h.b16 %v212
    %v2224 = vunpack.c.l.b16 %v213
    %v2225 = vunpack.c.h.b16 %v213
    %v2226 = vunpack.c.l.b16 %v214
    %v2227 = vunpack.c.h.b16 %v214
    %v2228 = vunpack.c.l.b16 %v215
    %v2229 = vunpack.c.h.b16 %v215
    %v2230 = vunpack.c.l.b16 %v216
    %v2231 = vunpack.c.h.b16 %v216
    %v2232 = vunpack.c.l.b16 %v217
    %v2233 = vunpack.c.h.b16 %v217
    %v2234 = vunpack.c.l.b16 %v218
    %v2235 = vunpack.c.h.b16 %v218
    %v2236 = vunpack.c.l.b16 %v219
    %v2237 = vunpack.c.h.b16 %v219
    %v2238 = vunpack.c.l.b16 %v220
    %v2239 = vunpack.c.h.b16 %v220
    %v2240 = vunpack.c.l.b16 %v221
    %v2241 = vunpack.c.h.b16 %v221
    %v2242 = vunpack.c.l.b16 %v222
    %v2243 = vunpack.c.h.b16 %v222
    %v2244 = vunpack.c.l.b16 %v223
    %v2245 = vunpack.c.h.b16 %v223
    %v2246 = vunpack.c.l.b16 %v224
    %v2247 = vunpack.c.h.b16 %v224
    %v2248 = vunpack.c.l.b16 %v225
    %v2249 = vunpack.c.h.b16 %v225
    %v2250 = vunpack.c.l.b16 %v226
    %v2251 = vunpack.c.h.b16 %v226
    %v2252 = vunpack.c.l.b16 %v227
    %v2253 = vunpack.c.h.b16 %v227
    %v2254 = vunpack.c.l.b16 %v228
    %v2255 = vunpack.c.h.b16 %v228
    %v2256 = vunpack.c.l.b16 %v229
    %v2257 = vunpack.c.h.b16 %v229
    %v2258 = vunpack.c.l.b16 %v230
    %v2259 = vunpack.c.h.b16 %v230
    %v2260 = vunpack.c.l.b16 %v231
    %v2261 = vunpack.c.h.b16 %v231
    %v2262 = vunpack.c.l.b16 %v232
    %v2263 = vunpack.c.h.b16 %v232
    %v2264 = vunpack.c.l.b16 %v233
    %v2265 = vunpack.c.h.b16 %v233
    %v2266 = vunpack.c.l.b16 %v234
    %v2267 = vunpack.c.h.b16 %v234
    %v2268 = vunpack.c.l.b16 %v235
    %v2269 = vunpack.c.h.b16 %v235
    %v2270 = vunpack.c.l.b16 %v236
    %v2271 = vunpack.c.h.b16 %v236
    %v2272 = vunpack.c.l.b16 %v237
    %v2273 = vunpack.c.h.b16 %v237
    %v2274 = vunpack.c.l.b16 %v238
    %v2275 = vunpack.c.h.b16 %v238
    %v2276 = vunpack.c.l.b16 %v239
    %v2277 = vunpack.c.h.b16 %v239
    %v2278 = vunpack.c.l.b16 %v240
    %v2279 = vunpack.c.h.b16 %v240
    %v2280 = vunpack.c.l.b16 %v241
    %v2281 = vunpack.c.h.b16 %v241
    %v2282 = vunpack.c.l.b16 %v242
    %v2283 = vunpack.c.h.b16 %v242
    %v2284 = vunpack.c.l.b16 %v243
    %v2285 = vunpack.c.h.b16 %v243
    %v2286 = vunpack.c.l.b16 %v244
    %v2287 = vunpack.c.h.b16 %v244
    %v2288 = vunpack.c.l.b16 %v245
    %v2289 = vunpack.c.h.b16 %v245
    %v2290 = vunpack.c.l.b16 %v246
    %v2291 = vunpack.c.h.b16 %v246
    %v2292 = vunpack.c.l.b16 %v247
    %v2293 = vunpack.c.h.b16 %v247
    %v2294 = vunpack.c.l.b16 %v248
    %v2295 = vunpack.c.h.b16 %v248
    %v2296 = vunpack.c.l.b16 %v249
    %v2297 = vunpack.c.h.b16 %v249
    %v2298 = vunpack.c.l.b16 %v250
    %v2299 = vunpack.c.h.b16 %v250
    %v2300 = vunpack.c.l.b16 %v251
    %v2301 = vunpack.c.h.b16 %v251
    %v2302 = vunpack.c.l.b16 %v252
    %v2303 = vunpack.c.h.b16 %v252
    %v2304 = vunpack.c.l.b16 %v253
    %v2305 = vunpack.c.h.b16 %v253
    %v2306 = vunpack.c.l.b16 %v254
    %v2307 = vunpack.c.h.b16 %v254
    %v2308 = vunpack.c.l.b16 %v255
    %v2309 = vunpack.c.h.b16 %v255
    %v2310 = vunpack.c.l.b16 %v256
    %v2311 = vunpack.c.h.b16 %v256
    %v2312 = vunpack.c.l.b16 %v257
    %v2313 = vunpack.c.h.b16 %v257
    %v2314 = vunpack.c.l.b16 %v258
    %v2315 = vunpack.c.h.b16 %v258
    %v2316 = vunpack.c.l.b16 %v259
    %v2317 = vunpack.c.h.b16 %v259
    %v2318 = vunpack.c.l.b16 %v260
    %v2319 = vunpack.c.h.b16 %v260
    %v2320 = vunpack.c.l.b16 %v261
    %v2321 = vunpack.c.h.b16 %v261
    %v2322 = vunpack.c.l.b16 %v262
    %v2323 = vunpack.c.h.b16 %v262
    %v2324 = vunpack.c.l.b16 %v263
    %v2325 = vunpack.c.h.b16 %v263
    %v2326 = vunpack.c.l.b16 %v264
    %v2327 = vunpack.c.h.b16 %v264
    %v2328 = vunpack.c.l.b16 %v265
    %v2329 = vunpack.c.h.b16 %v265
    %v2330 = vunpack.c.l.b16 %v266
    %v2331 = vunpack.c.h.b16 %v266
    %v2332 = vunpack.c.l.b16 %v267
    %v2333 = vunpack.c.h.b16 %v267
    %v2334 = vunpack.c.l.b16 %v268
    %v2335 = vunpack.c.h.b16 %v268
    %v2336 = vunpack.c.l.b16 %v269
    %v2337 = vunpack.c.h.b16 %v269
    %v2338 = vunpack.c.l.b16 %v270
    %v2339 = vunpack.c.h.b16 %v270
    %v2340 = vunpack.c.l.b16 %v271
    %v2341 = vunpack.c.h.b16 %v271
    %v2342 = vunpack.c.l.b16 %v272
    %v2343 = vunpack.c.h.b16 %v272
    %v2344 = vunpack.c.l.b16 %v273
    %v2345 = vunpack.c.h.b16 %v273
    %v2346 = vunpack.c.l.b16 %v274
    %v2347 = vunpack.c.h.b16 %v274
    %v2348 = vunpack.c.l.b16 %v275
    %v2349 = vunpack.c.h.b16 %v275
    %v2350 = vunpack.c.l.b16 %v276
    %v2351 = vunpack.c.h.b16 %v276
    %v2352 = vunpack.c.l.b16 %v277
    %v2353 = vunpack.c.h.b16 %v277
    %v2354 = vunpack.c.l.b16 %v278
    %v2355 = vunpack.c.h.b16 %v278
    %v2356 = vunpack.c.l.b16 %v279
    %v2357 = vunpack.c.h.b16 %v279
    %v2358 = vunpack.c.l.b16 %v280
    %v2359 = vunpack.c.h.b16 %v280
    %v2360 = vunpack.c.l.b16 %v281
    %v2361 = vunpack.c.h.b16 %v281
    %v2362 = vunpack.c.l.b16 %v282
    %v2363 = vunpack.c.h.b16 %v282
    %v2364 = vunpack.c.l.b16 %v283
    %v2365 = vunpack.c.h.b16 %v283
    %v2366 = vunpack.c.l.b16 %v284
    %v2367 = vunpack.c.h.b16 %v284
    %v2368 = vpack.c.b16 %v1988, %v1984
    %v2369 = vpack.c.b16 %v1989, %v1985
    %v2370 = vpack.c.b16 %v1990, %v1986
    %v2371 = vpack.c.b16 %v1991, %v1987
    %v2372 = vpack.c.b16 %v1996, %v1992
    %v2373 = vpack.c.b16 %v1997, %v1993
    %v2374 = vpack.c.b16 %v1998, %v1994
    %v2375 = vpack.c.b16 %v1999, %v1995
    %v2376 = vpack.c.b16 %v2004, %v2000
    %v2377 = vpack.c.b16 %v2005, %v2001
    %v2378 = vpack.c.b16 %v2006, %v2002
    %v2379 = vpack.c.b16 %v2007, %v2003
    %v2380 = vpack.c.b16 %v2012, %v2008
    %v2381 = vpack.c.b16 %v2013, %v2009
    %v2382 = vpack.c.b16 %v2014, %v2010
    %v2383 = vpack.c.b16 %v2015, %v2011
    %v2384 = vpack.c.b16 %v2020, %v2016
    %v2385 = vpack.c.b16 %v2021, %v2017
    %v2386 = vpack.c.b16 %v2022, %v2018
    %v2387 = vpack.c.b16 %v2023, %v2019
    %v2388 = vpack.c.b16 %v2028, %v2024
    %v2389 = vpack.c.b16 %v2029, %v2025
    %v2390 = vpack.c.b16 %v2030, %v2026
    %v2391 = vpack.c.b16 %v2031, %v2027
    %v2392 = vpack.c.b16 %v2036, %v2032
    %v2393 = vpack.c.b16 %v2037, %v2033
    %v2394 = vpack.c.b16 %v2038, %v2034
    %v2395 = vpack.c.b16 %v2039, %v2035
    %v2396 = vpack.c.b16 %v2044, %v2040
    %v2397 = vpack.c.b16 %v2045, %v2041
    %v2398 = vpack.c.b16 %v2046, %v2042
    %v2399 = vpack.c.b16 %v2047, %v2043
    %v2400 = vpack.c.b16 %v2052, %v2048
    %v2401 = vpack.c.b16 %v2053, %v2049
    %v2402 = vpack.c.b16 %v2054, %v2050
    %v2403 = vpack.c.b16 %v2055, %v2051
    %v2404 = vpack.c.b16 %v2060, %v2056
    %v2405 = vpack.c.b16 %v2061, %v2057
    %v2406 = vpack.c.b16 %v2062, %v2058
    %v2407 = vpack.c.b16 %v2063, %v2059
    %v2408 = vpack.c.b16 %v2068, %v2064
    %v2409 = vpack.c.b16 %v2069, %v2065
    %v2410 = vpack.c.b16 %v2070, %v2066
    %v2411 = vpack.c.b16 %v2071, %v2067
    %v2412 = vpack.c.b16 %v2076, %v2072
    %v2413 = vpack.c.b16 %v2077, %v2073
    %v2414 = vpack.c.b16 %v2078, %v2074
    %v2415 = vpack.c.b16 %v2079, %v2075
    %v2416 = vpack.c.b16 %v2084, %v2080
    %v2417 = vpack.c.b16 %v2085, %v2081
    %v2418 = vpack.c.b16 %v2086, %v2082
    %v2419 = vpack.c.b16 %v2087, %v2083
    %v2420 = vpack.c.b16 %v2092, %v2088
    %v2421 = vpack.c.b16 %v2093, %v2089
    %v2422 = vpack.c.b16 %v2094, %v2090
    %v2423 = vpack.c.b16 %v2095, %v2091
    %v2424 = vpack.c.b16 %v2100, %v2096
    %v2425 = vpack.c.b16 %v2101, %v2097
    %v2426 = vpack.c.b16 %v2102, %v2098
    %v2427 = vpack.c.b16 %v2103, %v2099
    %v2428 = vpack.c.b16 %v2108, %v2104
    %v2429 = vpack.c.b16 %v2109, %v2105
    %v2430 = vpack.c.b16 %v2110, %v2106
    %v2431 = vpack.c.b16 %v2111, %v2107
    %v2432 = vpack.c.b16 %v2116, %v2112
    %v2433 = vpack.c.b16 %v2117, %v2113
    %v2434 = vpack.c.b16 %v2118, %v2114
    %v2435 = vpack.c.b16 %v2119, %v2115
    %v2436 = vpack.c.b16 %v2124, %v2120
    %v2437 = vpack.c.b16 %v2125, %v2121
    %v2438 = vpack.c.b16 %v2126, %v2122
    %v2439 = vpack.c.b16 %v2127, %v2123
    %v2440 = vpack.c.b16 %v2132, %v2128
    %v2441 = vpack.c.b16 %v2133, %v2129
    %v2442 = vpack.c.b16 %v2134, %v2130
    %v2443 = vpack.c.b16 %v2135, %v2131
    %v2444 = vpack.c.b16 %v2140, %v2136
    %v2445 = vpack.c.b16 %v2141, %v2137
    %v2446 = vpack.c.b16 %v2142, %v2138
    %v2447 = vpack.c.b16 %v2143, %v2139
    %v2448 = vpack.c.b16 %v2148, %v2144
    %v2449 = vpack.c.b16 %v2149, %v2145
    %v2450 = vpack.c.b16 %v2150, %v2146
    %v2451 = vpack.c.b16 %v2151, %v2147
    %v2452 = vpack.c.b16 %v2156, %v2152
    %v2453 = vpack.c.b16 %v2157, %v2153
    %v2454 = vpack.c.b16 %v2158, %v2154
    %v2455 = vpack.c.b16 %v2159, %v2155
    %v2456 = vpack.c.b16 %v2164, %v2160
    %v2457 = vpack.c.b16 %v2165, %v2161
    %v2458 = vpack.c.b16 %v2166, %v2162
    %v2459 = vpack.c.b16 %v2167, %v2163
    %v2460 = vpack.c.b16 %v2172, %v2168
    %v2461 = vpack.c.b16 %v2173, %v2169
    %v2462 = vpack.c.b16 %v2174, %v2170
    %v2463 = vpack.c.b16 %v2175, %v2171
    %v2464 = vpack.c.b16 %v2180, %v2176
    %v2465 = vpack.c.b16 %v2181, %v2177
    %v2466 = vpack.c.b16 %v2182, %v2178
    %v2467 = vpack.c.b16 %v2183, %v2179
    %v2468 = vpack.c.b16 %v2188, %v2184
    %v2469 = vpack.c.b16 %v2189, %v2185
    %v2470 = vpack.c.b16 %v2190, %v2186
    %v2471 = vpack.c.b16 %v2191, %v2187
    %v2472 = vpack.c.b16 %v2196, %v2192
    %v2473 = vpack.c.b16 %v2197, %v2193
    %v2474 = vpack.c.b16 %v2198, %v2194
    %v2475 = vpack.c.b16 %v2199, %v2195
    %v2476 = vpack.c.b16 %v2204, %v2200
    %v2477 = vpack.c.b16 %v2205, %v2201
    %v2478 = vpack.c.b16 %v2206, %v2202
    %v2479 = vpack.c.b16 %v2207, %v2203
    %v2480 = vpack.c.b16 %v2212, %v2208
    %v2481 = vpack.c.b16 %v2213, %v2209
    %v2482 = vpack.c.b16 %v2214, %v2210
    %v2483 = vpack.c.b16 %v2215, %v2211
    %v2484 = vpack.c.b16 %v2220, %v2216
    %v2485 = vpack.c.b16 %v2221, %v2217
    %v2486 = vpack.c.b16 %v2222, %v2218
    %v2487 = vpack.c.b16 %v2223, %v2219
    %v2488 = vpack.c.b16 %v2228, %v2224
    %v2489 = vpack.c.b16 %v2229, %v2225
    %v2490 = vpack.c.b16 %v2230, %v2226
    %v2491 = vpack.c.b16 %v2231, %v2227
    %v2492 = vpack.c.b16 %v2236, %v2232
    %v2493 = vpack.c.b16 %v2237, %v2233
    %v2494 = vpack.c.b16 %v2238, %v2234
    %v2495 = vpack.c.b16 %v2239, %v2235
    %v2496 = vpack.c.b16 %v2244, %v2240
    %v2497 = vpack.c.b16 %v2245, %v2241
    %v2498 = vpack.c.b16 %v2246, %v2242
    %v2499 = vpack.c.b16 %v2247, %v2243
    %v2500 = vpack.c.b16 %v2252, %v2248
    %v2501 = vpack.c.b16 %v2253, %v2249
    %v2502 = vpack.c.b16 %v2254, %v2250
    %v2503 = vpack.c.b16 %v2255, %v2251
    %v2504 = vpack.c.b16 %v2260, %v2256
    %v2505 = vpack.c.b16 %v2261, %v2257
    %v2506 = vpack.c.b16 %v2262, %v2258
    %v2507 = vpack.c.b16 %v2263, %v2259
    %v2508 = vpack.c.b16 %v2268, %v2264
    %v2509 = vpack.c.b16 %v2269, %v2265
    %v2510 = vpack.c.b16 %v2270, %v2266
    %v2511 = vpack.c.b16 %v2271, %v2267
    %v2512 = vpack.c.b16 %v2276, %v2272
    %v2513 = vpack.c.b16 %v2277, %v2273
    %v2514 = vpack.c.b16 %v2278, %v2274
    %v2515 = vpack.c.b16 %v2279, %v2275
    %v2516 = vpack.c.b16 %v2284, %v2280
    %v2517 = vpack.c.b16 %v2285, %v2281
    %v2518 = vpack.c.b16 %v2286, %v2282
    %v2519 = vpack.c.b16 %v2287, %v2283
    %v2520 = vpack.c.b16 %v2292, %v2288
    %v2521 = vpack.c.b16 %v2293, %v2289
    %v2522 = vpack.c.b16 %v2294, %v2290
    %v2523 = vpack.c.b16 %v2295, %v2291
    %v2524 = vpack.c.b16 %v2300, %v2296
    %v2525 = vpack.c.b16 %v2301, %v2297
    %v2526 = vpack.c.b16 %v2302, %v2298
    %v2527 = vpack.c.b16 %v2303, %v2299
    %v2528 = vpack.c.b16 %v2308, %v2304
    %v2529 = vpack.c.b16 %v2309, %v2305
    %v2530 = vpack.c.b16 %v2310, %v2306
    %v2531 = vpack.c.b16 %v2311, %v2307
    %v2532 = vpack.c.b16 %v2316, %v2312
    %v2533 = vpack.c.b16 %v2317, %v2313
    %v2534 = vpack.c.b16 %v2318, %v2314
    %v2535 = vpack.c.b16 %v2319, %v2315
    %v2536 = vpack.c.b16 %v2324, %v2320
    %v2537 = vpack.c.b16 %v2325, %v2321
    %v2538 = vpack.c.b16 %v2326, %v2322
    %v2539 = vpack.c.b16 %v2327, %v2323
    %v2540 = vpack.c.b16 %v2332, %v2328
    %v2541 = vpack.c.b16 %v2333, %v2329
    %v2542 = vpack.c.b16 %v2334, %v2330
    %v2543 = vpack.c.b16 %v2335, %v2331
    %v2544 = vpack.c.b16 %v2340, %v2336
    %v2545 = vpack.c.b16 %v2341, %v2337
    %v2546 = vpack.c.b16 %v2342, %v2338
    %v2547 = vpack.c.b16 %v2343, %v2339
    %v2548 = vpack.c.b16 %v2348, %v2344
    %v2549 = vpack.c.b16 %v2349, %v2345
    %v2550 = vpack.c.b16 %v2350, %v2346
    %v2551 = vpack.c.b16 %v2351, %v2347
    %v2552 = vpack.c.b16 %v2356, %v2352
    %v2553 = vpack.c.b16 %v2357, %v2353
    %v2554 = vpack.c.b16 %v2358, %v2354
    %v2555 = vpack.c.b16 %v2359, %v2355
    %v2556 = vpack.c.b16 %v2364, %v2360
    %v2557 = vpack.c.b16 %v2365, %v2361
    %v2558 = vpack.c.b16 %v2366, %v2362
    %v2559 = vpack.c.b16 %v2367, %v2363
    %2752 = vmatprep.subr.bf16.mxu0 %v2369
    %2753 = vmatpush1.bf16.msra.mxu0 %v2368
    %2754 = vmatprep.subr.bf16.mxu0 %v2373
    %2755 = vmatpush1.bf16.msra.mxu0 %v2372
    %2756 = vmatprep.subr.bf16.mxu0 %v2377
    %2757 = vmatpush1.bf16.msra.mxu0 %v2376
    %2758 = vmatprep.subr.bf16.mxu0 %v2381
    %2759 = vmatpush1.bf16.msra.mxu0 %v2380
    %2760 = vmatprep.subr.bf16.mxu0 %v2385
    %2761 = vmatpush1.bf16.msra.mxu0 %v2384
    %2762 = vmatprep.subr.bf16.mxu0 %v2389
    %2763 = vmatpush1.bf16.msra.mxu0 %v2388
    %2764 = vmatprep.subr.bf16.mxu0 %v2393
    %2765 = vmatpush1.bf16.msra.mxu0 %v2392
    %2766 = vmatprep.subr.bf16.mxu0 %v2397
    %2767 = vmatpush1.bf16.msra.mxu0 %v2396
    %2768 = vmatprep.subr.bf16.mxu0 %v2401
    %2769 = vmatpush1.bf16.msra.mxu0 %v2400
    %2770 = vmatprep.subr.bf16.mxu0 %v2405
    %2771 = vmatpush1.bf16.msra.mxu0 %v2404
    %2772 = vmatprep.subr.bf16.mxu0 %v2409
    %2773 = vmatpush1.bf16.msra.mxu0 %v2408
    %2774 = vmatprep.subr.bf16.mxu0 %v2413
    %2775 = vmatpush1.bf16.msra.mxu0 %v2412
    %2776 = vmatprep.subr.bf16.mxu0 %v2417
    %2777 = vmatpush1.bf16.msra.mxu0 %v2416
    %2778 = vmatprep.subr.bf16.mxu0 %v2421
    %2779 = vmatpush1.bf16.msra.mxu0 %v2420
    %2780 = vmatprep.subr.bf16.mxu0 %v2425
    %2781 = vmatpush1.bf16.msra.mxu0 %v2424
    %2782 = vmatprep.subr.bf16.mxu0 %v2429
    %2783 = vmatpush1.bf16.msra.mxu0 %v2428
    %2784 = vmatprep.mubr.bf16.mxu0 %v1776
    %2785 = vmatmul.mubr.bf16.gmra.mrb[0].mxu0 %v1762
    %v2786 = vpop.f32.mrb[0].mxu0
    %v2787 = vadd.f32 %v1609, %v2786
    %v2788 = vpop.f32.mrb[0].mxu0
    %v2789 = vadd.f32 %v1611, %v2788
    %v2790 = vpop.f32.mrb[0].mxu0
    %v2791 = vpop.f32.mrb[0].mxu0
    %2792 = vdwg.mxu0
    %2793 = vmatprep.subr.bf16.mxu0 %v2433
    %2794 = vmatpush1.bf16.msra.mxu0 %v2432
    %2795 = vmatprep.subr.bf16.mxu0 %v2437
    %2796 = vmatpush1.bf16.msra.mxu0 %v2436
    %2797 = vmatprep.subr.bf16.mxu0 %v2441
    %2798 = vmatpush1.bf16.msra.mxu0 %v2440
    %2799 = vmatprep.subr.bf16.mxu0 %v2445
    %2800 = vmatpush1.bf16.msra.mxu0 %v2444
    %2801 = vmatprep.subr.bf16.mxu0 %v2449
    %2802 = vmatpush1.bf16.msra.mxu0 %v2448
    %2803 = vmatprep.subr.bf16.mxu0 %v2453
    %2804 = vmatpush1.bf16.msra.mxu0 %v2452
    %2805 = vmatprep.subr.bf16.mxu0 %v2457
    %2806 = vmatpush1.bf16.msra.mxu0 %v2456
    %2807 = vmatprep.subr.bf16.mxu0 %v2461
    %2808 = vmatpush1.bf16.msra.mxu0 %v2460
    %2809 = vmatprep.subr.bf16.mxu0 %v2465
    %2810 = vmatpush1.bf16.msra.mxu0 %v2464
    %2811 = vmatprep.subr.bf16.mxu0 %v2469
    %2812 = vmatpush1.bf16.msra.mxu0 %v2468
    %2813 = vmatprep.subr.bf16.mxu0 %v2473
    %2814 = vmatpush1.bf16.msra.mxu0 %v2472
    %2815 = vmatprep.subr.bf16.mxu0 %v2477
    %2816 = vmatpush1.bf16.msra.mxu0 %v2476
    %2817 = vmatprep.subr.bf16.mxu0 %v2481
    %2818 = vmatpush1.bf16.msra.mxu0 %v2480
    %2819 = vmatprep.subr.bf16.mxu0 %v2485
    %2820 = vmatpush1.bf16.msra.mxu0 %v2484
    %2821 = vmatprep.subr.bf16.mxu0 %v2489
    %2822 = vmatpush1.bf16.msra.mxu0 %v2488
    %2823 = vmatprep.subr.bf16.mxu0 %v2493
    %2824 = vmatpush1.bf16.msra.mxu0 %v2492
    %2825 = vmatprep.mubr.bf16.mxu0 %v1785
    %2826 = vmatmul.mubr.bf16.gmra.mrb[0].mxu0 %v1784
    %v2827 = vpop.f32.mrb[0].mxu0
    %v2828 = vadd.f32 %v2787, %v2827
    %v2829 = vpop.f32.mrb[0].mxu0
    %v2830 = vadd.f32 %v2789, %v2829
    %v2831 = vpop.f32.mrb[0].mxu0
    %v2832 = vpop.f32.mrb[0].mxu0
    %2833 = vdwg.mxu0
    %2834 = vmatprep.subr.bf16.mxu0 %v2497
    %2835 = vmatpush1.bf16.msra.mxu0 %v2496
    %2836 = vmatprep.subr.bf16.mxu0 %v2501
    %2837 = vmatpush1.bf16.msra.mxu0 %v2500
    %2838 = vmatprep.subr.bf16.mxu0 %v2505
    %2839 = vmatpush1.bf16.msra.mxu0 %v2504
    %2840 = vmatprep.subr.bf16.mxu0 %v2509
    %2841 = vmatpush1.bf16.msra.mxu0 %v2508
    %2842 = vmatprep.subr.bf16.mxu0 %v2513
    %2843 = vmatpush1.bf16.msra.mxu0 %v2512
    %2844 = vmatprep.subr.bf16.mxu0 %v2517
    %2845 = vmatpush1.bf16.msra.mxu0 %v2516
    %2846 = vmatprep.subr.bf16.mxu0 %v2521
    %2847 = vmatpush1.bf16.msra.mxu0 %v2520
    %2848 = vmatprep.subr.bf16.mxu0 %v2525
    %2849 = vmatpush1.bf16.msra.mxu0 %v2524
    %2850 = vmatprep.subr.bf16.mxu0 %v2529
    %2851 = vmatpush1.bf16.msra.mxu0 %v2528
    %2852 = vmatprep.subr.bf16.mxu0 %v2533
    %2853 = vmatpush1.bf16.msra.mxu0 %v2532
    %2854 = vmatprep.subr.bf16.mxu0 %v2537
    %2855 = vmatpush1.bf16.msra.mxu0 %v2536
    %2856 = vmatprep.subr.bf16.mxu0 %v2541
    %2857 = vmatpush1.bf16.msra.mxu0 %v2540
    %2858 = vmatprep.subr.bf16.mxu0 %v2545
    %2859 = vmatpush1.bf16.msra.mxu0 %v2544
    %2860 = vmatprep.subr.bf16.mxu0 %v2549
    %2861 = vmatpush1.bf16.msra.mxu0 %v2548
    %2862 = vmatprep.subr.bf16.mxu0 %v2553
    %2863 = vmatpush1.bf16.msra.mxu0 %v2552
    %2864 = vmatprep.subr.bf16.mxu0 %v2557
    %2865 = vmatpush1.bf16.msra.mxu0 %v2556
    %2866 = vmatprep.mubr.bf16.mxu0 %v1783
    %2867 = vmatmul.mubr.bf16.gmra.mrb[0].mxu0 %v1769
    %v2868 = vpop.f32.mrb[0].mxu0
    %v2869 = vadd.f32 %v2828, %v2868
    %v2870 = vpop.f32.mrb[0].mxu0
    %v2871 = vadd.f32 %v2830, %v2870
    %v2872 = vpop.f32.mrb[0].mxu0
    %v2873 = vpop.f32.mrb[0].mxu0
    %2874 = vdwg.mxu0
    %2875 = vmatprep.subr.bf16.mxu0 %v2371
    %2876 = vmatpush1.bf16.msra.mxu0 %v2370
    %2877 = vmatprep.subr.bf16.mxu0 %v2375
    %2878 = vmatpush1.bf16.msra.mxu0 %v2374
    %2879 = vmatprep.subr.bf16.mxu0 %v2379
    %2880 = vmatpush1.bf16.msra.mxu0 %v2378
    %2881 = vmatprep.subr.bf16.mxu0 %v2383
    %2882 = vmatpush1.bf16.msra.mxu0 %v2382
    %2883 = vmatprep.subr.bf16.mxu0 %v2387
    %2884 = vmatpush1.bf16.msra.mxu0 %v2386
    %2885 = vmatprep.subr.bf16.mxu0 %v2391
    %2886 = vmatpush1.bf16.msra.mxu0 %v2390
    %2887 = vmatprep.subr.bf16.mxu0 %v2395
    %2888 = vmatpush1.bf16.msra.mxu0 %v2394
    %2889 = vmatprep.subr.bf16.mxu0 %v2399
    %2890 = vmatpush1.bf16.msra.mxu0 %v2398
    %2891 = vmatprep.subr.bf16.mxu0 %v2403
    %2892 = vmatpush1.bf16.msra.mxu0 %v2402
    %2893 = vmatprep.subr.bf16.mxu0 %v2407
    %2894 = vmatpush1.bf16.msra.mxu0 %v2406
    %2895 = vmatprep.subr.bf16.mxu0 %v2411
    %2896 = vmatpush1.bf16.msra.mxu0 %v2410
    %2897 = vmatprep.subr.bf16.mxu0 %v2415
    %2898 = vmatpush1.bf16.msra.mxu0 %v2414
    %2899 = vmatprep.subr.bf16.mxu0 %v2419
    %2900 = vmatpush1.bf16.msra.mxu0 %v2418
    %2901 = vmatprep.subr.bf16.mxu0 %v2423
    %2902 = vmatpush1.bf16.msra.mxu0 %v2422
    %2903 = vmatprep.subr.bf16.mxu0 %v2427
    %2904 = vmatpush1.bf16.msra.mxu0 %v2426
    %2905 = vmatprep.subr.bf16.mxu0 %v2431
    %2906 = vmatpush1.bf16.msra.mxu0 %v2430
    %2907 = vmatprep.mubr.bf16.mxu0 %v1776
    %2908 = vmatmul.mubr.bf16.gmra.mrb[0].mxu0 %v1762
    %v2909 = vpop.f32.mrb[0].mxu0
    %v2910 = vadd.f32 %v1732, %v2909
    %v2911 = vpop.f32.mrb[0].mxu0
    %v2912 = vadd.f32 %v1734, %v2911
    %v2913 = vpop.f32.mrb[0].mxu0
    %v2914 = vpop.f32.mrb[0].mxu0
    %2915 = vdwg.mxu0
    %2916 = vmatprep.subr.bf16.mxu0 %v2435
    %2917 = vmatpush1.bf16.msra.mxu0 %v2434
    %2918 = vmatprep.subr.bf16.mxu0 %v2439
    %2919 = vmatpush1.bf16.msra.mxu0 %v2438
    %2920 = vmatprep.subr.bf16.mxu0 %v2443
    %2921 = vmatpush1.bf16.msra.mxu0 %v2442
    %2922 = vmatprep.subr.bf16.mxu0 %v2447
    %2923 = vmatpush1.bf16.msra.mxu0 %v2446
    %2924 = vmatprep.subr.bf16.mxu0 %v2451
    %2925 = vmatpush1.bf16.msra.mxu0 %v2450
    %2926 = vmatprep.subr.bf16.mxu0 %v2455
    %2927 = vmatpush1.bf16.msra.mxu0 %v2454
    %2928 = vmatprep.subr.bf16.mxu0 %v2459
    %2929 = vmatpush1.bf16.msra.mxu0 %v2458
    %2930 = vmatprep.subr.bf16.mxu0 %v2463
    %2931 = vmatpush1.bf16.msra.mxu0 %v2462
    %2932 = vmatprep.subr.bf16.mxu0 %v2467
    %2933 = vmatpush1.bf16.msra.mxu0 %v2466
    %2934 = vmatprep.subr.bf16.mxu0 %v2471
    %2935 = vmatpush1.bf16.msra.mxu0 %v2470
    %2936 = vmatprep.subr.bf16.mxu0 %v2475
    %2937 = vmatpush1.bf16.msra.mxu0 %v2474
    %2938 = vmatprep.subr.bf16.mxu0 %v2479
    %2939 = vmatpush1.bf16.msra.mxu0 %v2478
    %2940 = vmatprep.subr.bf16.mxu0 %v2483
    %2941 = vmatpush1.bf16.msra.mxu0 %v2482
    %2942 = vmatprep.subr.bf16.mxu0 %v2487
    %2943 = vmatpush1.bf16.msra.mxu0 %v2486
    %2944 = vmatprep.subr.bf16.mxu0 %v2491
    %2945 = vmatpush1.bf16.msra.mxu0 %v2490
    %2946 = vmatprep.subr.bf16.mxu0 %v2495
    %2947 = vmatpush1.bf16.msra.mxu0 %v2494
    %2948 = vmatprep.mubr.bf16.mxu0 %v1785
    %2949 = vmatmul.mubr.bf16.gmra.mrb[0].mxu0 %v1784
    %v2950 = vpop.f32.mrb[0].mxu0
    %v2951 = vadd.f32 %v2910, %v2950
    %v2952 = vpop.f32.mrb[0].mxu0
    %v2953 = vadd.f32 %v2912, %v2952
    %v2954 = vpop.f32.mrb[0].mxu0
    %v2955 = vpop.f32.mrb[0].mxu0
    %2956 = vdwg.mxu0
    %2957 = vmatprep.subr.bf16.mxu0 %v2499
    %2958 = vmatpush1.bf16.msra.mxu0 %v2498
    %2959 = vmatprep.subr.bf16.mxu0 %v2503
    %2960 = vmatpush1.bf16.msra.mxu0 %v2502
    %2961 = vmatprep.subr.bf16.mxu0 %v2507
    %2962 = vmatpush1.bf16.msra.mxu0 %v2506
    %2963 = vmatprep.subr.bf16.mxu0 %v2511
    %2964 = vmatpush1.bf16.msra.mxu0 %v2510
    %2965 = vmatprep.subr.bf16.mxu0 %v2515
    %2966 = vmatpush1.bf16.msra.mxu0 %v2514
    %2967 = vmatprep.subr.bf16.mxu0 %v2519
    %2968 = vmatpush1.bf16.msra.mxu0 %v2518
    %2969 = vmatprep.subr.bf16.mxu0 %v2523
    %2970 = vmatpush1.bf16.msra.mxu0 %v2522
    %2971 = vmatprep.subr.bf16.mxu0 %v2527
    %2972 = vmatpush1.bf16.msra.mxu0 %v2526
    %2973 = vmatprep.subr.bf16.mxu0 %v2531
    %2974 = vmatpush1.bf16.msra.mxu0 %v2530
    %2975 = vmatprep.subr.bf16.mxu0 %v2535
    %2976 = vmatpush1.bf16.msra.mxu0 %v2534
    %2977 = vmatprep.subr.bf16.mxu0 %v2539
    %2978 = vmatpush1.bf16.msra.mxu0 %v2538
    %2979 = vmatprep.subr.bf16.mxu0 %v2543
    %2980 = vmatpush1.bf16.msra.mxu0 %v2542
    %2981 = vmatprep.subr.bf16.mxu0 %v2547
    %2982 = vmatpush1.bf16.msra.mxu0 %v2546
    %2983 = vmatprep.subr.bf16.mxu0 %v2551
    %2984 = vmatpush1.bf16.msra.mxu0 %v2550
    %2985 = vmatprep.subr.bf16.mxu0 %v2555
    %2986 = vmatpush1.bf16.msra.mxu0 %v2554
    %2987 = vmatprep.subr.bf16.mxu0 %v2559
    %2988 = vmatpush1.bf16.msra.mxu0 %v2558
    %2989 = vmatprep.mubr.bf16.mxu0 %v1783
    %2990 = vmatmul.mubr.bf16.gmra.mrb[0].mxu0 %v1769
    %v2991 = vpop.f32.mrb[0].mxu0
    %v2992 = vadd.f32 %v2951, %v2991
    %v2993 = vpop.f32.mrb[0].mxu0
    %v2994 = vadd.f32 %v2953, %v2993
    %v2995 = vpop.f32.mrb[0].mxu0
    %v2996 = vpop.f32.mrb[0].mxu0
    %2997 = vdwg.mxu0
    %v2998 = vld [vmem:[%s4] sm:$0xf]
    %v3000 = vlaneseq
    %v3001 = vshrl.u32 %v3000, 7
    %v3002 = vsub.s32 0, %v3001
    %v3003 = vrot.slane %v2998, %v3002
    %v3004 = vlaneseq
    %v3005 = vshrl.u32 %v3004, 7
    %v3006 = vsub.s32 1, %v3005
    %v3007 = vrot.slane %v2998, %v3006
    %v3008 = vlaneseq
    %v3009 = vshrl.u32 %v3008, 7
    %v3010 = vsub.s32 2, %v3009
    %v3011 = vrot.slane %v2998, %v3010
    %v3012 = vlaneseq
    %v3013 = vshrl.u32 %v3012, 7
    %v3014 = vsub.s32 3, %v3013
    %v3015 = vrot.slane %v2998, %v3014
    %v3020 = vadd.f32 %v2869, %v3003
    %v3021 = vadd.f32 %v2871, %v3007
    %v3022 = vadd.f32 %v2992, %v3011
    %v3023 = vadd.f32 %v2994, %v3015
    %v3024 = vmax.f32 %v3020, 0.0
    %v3025 = vmax.f32 %v3021, 0.0
    %v3026 = vmax.f32 %v3022, 0.0
    %v3027 = vmax.f32 %v3023, 0.0
    %v3028 = vpack.c.bf16 %v3024, %v3024
    %v3029 = vpack.c.bf16 %v3025, %v3025
    %v3030 = vpack.c.bf16 %v3026, %v3026
    %v3031 = vpack.c.bf16 %v3027, %v3027
    %v3032 = vld [vmem:[#allocation10] sm:$0xf]
    %v3033 = vld [vmem:[#allocation10 + $0x4] sm:$0xf]
    %v3034 = vld [vmem:[#allocation10 + $0x8] sm:$0xf]
    %v3035 = vld [vmem:[#allocation10 + $0xc] sm:$0xf]
    %v3036 = vld [vmem:[#allocation10 + $0x10] sm:$0xf]
    %v3037 = vld [vmem:[#allocation10 + $0x14] sm:$0xf]
    %v3038 = vld [vmem:[#allocation10 + $0x18] sm:$0xf]
    %v3039 = vld [vmem:[#allocation10 + $0x1c] sm:$0xf]
    %v3040 = vld [vmem:[#allocation10 + $0x20] sm:$0xf]
    %v3041 = vld [vmem:[#allocation10 + $0x24] sm:$0xf]
    %v3042 = vld [vmem:[#allocation10 + $0x28] sm:$0xf]
    %v3043 = vld [vmem:[#allocation10 + $0x2c] sm:$0xf]
    %v3044 = vld [vmem:[#allocation10 + $0x30] sm:$0xf]
    %v3045 = vld [vmem:[#allocation10 + $0x34] sm:$0xf]
    %v3046 = vld [vmem:[#allocation10 + $0x38] sm:$0xf]
    %v3047 = vld [vmem:[#allocation10 + $0x3c] sm:$0xf]
    %v3048 = vld [vmem:[#allocation10 + $0x40] sm:$0xf]
    %v3049 = vld [vmem:[#allocation10 + $0x44] sm:$0xf]
    %v3050 = vld [vmem:[#allocation10 + $0x48] sm:$0xf]
    %v3051 = vld [vmem:[#allocation10 + $0x4c] sm:$0xf]
    %v3052 = vld [vmem:[#allocation10 + $0x50] sm:$0xf]
    %v3053 = vld [vmem:[#allocation10 + $0x54] sm:$0xf]
    %v3054 = vld [vmem:[#allocation10 + $0x58] sm:$0xf]
    %v3055 = vld [vmem:[#allocation10 + $0x5c] sm:$0xf]
    %v3056 = vld [vmem:[#allocation10 + $0x60] sm:$0xf]
    %v3057 = vld [vmem:[#allocation10 + $0x64] sm:$0xf]
    %v3058 = vld [vmem:[#allocation10 + $0x68] sm:$0xf]
    %v3059 = vld [vmem:[#allocation10 + $0x6c] sm:$0xf]
    %v3060 = vld [vmem:[#allocation10 + $0x70] sm:$0xf]
    %v3061 = vld [vmem:[#allocation10 + $0x74] sm:$0xf]
    %v3062 = vld [vmem:[#allocation10 + $0x78] sm:$0xf]
    %v3063 = vld [vmem:[#allocation10 + $0x7c] sm:$0xf]
    %v3064 = vld [vmem:[#allocation10 + $0x80] sm:$0xf]
    %v3065 = vld [vmem:[#allocation10 + $0x84] sm:$0xf]
    %v3066 = vld [vmem:[#allocation10 + $0x88] sm:$0xf]
    %v3067 = vld [vmem:[#allocation10 + $0x8c] sm:$0xf]
    %v3068 = vld [vmem:[#allocation10 + $0x90] sm:$0xf]
    %v3069 = vld [vmem:[#allocation10 + $0x94] sm:$0xf]
    %v3070 = vld [vmem:[#allocation10 + $0x98] sm:$0xf]
    %v3071 = vld [vmem:[#allocation10 + $0x9c] sm:$0xf]
    %v3072 = vld [vmem:[#allocation10 + $0xa0] sm:$0xf]
    %v3073 = vld [vmem:[#allocation10 + $0xa4] sm:$0xf]
    %v3074 = vld [vmem:[#allocation10 + $0xa8] sm:$0xf]
    %v3075 = vld [vmem:[#allocation10 + $0xac] sm:$0xf]
    %v3076 = vld [vmem:[#allocation10 + $0xb0] sm:$0xf]
    %v3077 = vld [vmem:[#allocation10 + $0xb4] sm:$0xf]
    %v3078 = vld [vmem:[#allocation10 + $0xb8] sm:$0xf]
    %v3079 = vld [vmem:[#allocation10 + $0xbc] sm:$0xf]
    %v3080 = vld [vmem:[#allocation10 + $0xc0] sm:$0xf]
    %v3081 = vld [vmem:[#allocation10 + $0xc4] sm:$0xf]
    %v3082 = vld [vmem:[#allocation10 + $0xc8] sm:$0xf]
    %v3083 = vld [vmem:[#allocation10 + $0xcc] sm:$0xf]
    %v3084 = vld [vmem:[#allocation10 + $0xd0] sm:$0xf]
    %v3085 = vld [vmem:[#allocation10 + $0xd4] sm:$0xf]
    %v3086 = vld [vmem:[#allocation10 + $0xd8] sm:$0xf]
    %v3087 = vld [vmem:[#allocation10 + $0xdc] sm:$0xf]
    %v3088 = vld [vmem:[#allocation10 + $0xe0] sm:$0xf]
    %v3089 = vld [vmem:[#allocation10 + $0xe4] sm:$0xf]
    %v3090 = vld [vmem:[#allocation10 + $0xe8] sm:$0xf]
    %v3091 = vld [vmem:[#allocation10 + $0xec] sm:$0xf]
    %v3092 = vld [vmem:[#allocation10 + $0xf0] sm:$0xf]
    %v3093 = vld [vmem:[#allocation10 + $0xf4] sm:$0xf]
    %v3094 = vld [vmem:[#allocation10 + $0xf8] sm:$0xf]
    %v3095 = vld [vmem:[#allocation10 + $0xfc] sm:$0xf]
    %v3096 = vld [vmem:[%s6] sm:$0x1]
    %v3098 = vlaneseq
    %v3099 = vshrl.u32 %v3098, 7
    %v3100 = vsub.s32 0, %v3099
    %v3101 = vrot.slane %v3096, %v3100
    %v3167 = vunpack.c.l.b16 %v3032
    %v3168 = vunpack.c.l.b16 %v3033
    %v3169 = vunpack.c.l.b16 %v3034
    %v3170 = vunpack.c.l.b16 %v3035
    %v3171 = vunpack.c.l.b16 %v3036
    %v3172 = vunpack.c.l.b16 %v3037
    %v3173 = vunpack.c.l.b16 %v3038
    %v3174 = vunpack.c.l.b16 %v3039
    %v3175 = vunpack.c.l.b16 %v3040
    %v3176 = vunpack.c.l.b16 %v3041
    %v3177 = vunpack.c.l.b16 %v3042
    %v3178 = vunpack.c.l.b16 %v3043
    %v3179 = vunpack.c.l.b16 %v3044
    %v3180 = vunpack.c.l.b16 %v3045
    %v3181 = vunpack.c.l.b16 %v3046
    %v3182 = vunpack.c.l.b16 %v3047
    %v3183 = vunpack.c.l.b16 %v3048
    %v3184 = vunpack.c.l.b16 %v3049
    %v3185 = vunpack.c.l.b16 %v3050
    %v3186 = vunpack.c.l.b16 %v3051
    %v3187 = vunpack.c.l.b16 %v3052
    %v3188 = vunpack.c.l.b16 %v3053
    %v3189 = vunpack.c.l.b16 %v3054
    %v3190 = vunpack.c.l.b16 %v3055
    %v3191 = vunpack.c.l.b16 %v3056
    %v3192 = vunpack.c.l.b16 %v3057
    %v3193 = vunpack.c.l.b16 %v3058
    %v3194 = vunpack.c.l.b16 %v3059
    %v3195 = vunpack.c.l.b16 %v3060
    %v3196 = vunpack.c.l.b16 %v3061
    %v3197 = vunpack.c.l.b16 %v3062
    %v3198 = vunpack.c.l.b16 %v3063
    %v3199 = vunpack.c.l.b16 %v3064
    %v3200 = vunpack.c.l.b16 %v3065
    %v3201 = vunpack.c.l.b16 %v3066
    %v3202 = vunpack.c.l.b16 %v3067
    %v3203 = vunpack.c.l.b16 %v3068
    %v3204 = vunpack.c.l.b16 %v3069
    %v3205 = vunpack.c.l.b16 %v3070
    %v3206 = vunpack.c.l.b16 %v3071
    %v3207 = vunpack.c.l.b16 %v3072
    %v3208 = vunpack.c.l.b16 %v3073
    %v3209 = vunpack.c.l.b16 %v3074
    %v3210 = vunpack.c.l.b16 %v3075
    %v3211 = vunpack.c.l.b16 %v3076
    %v3212 = vunpack.c.l.b16 %v3077
    %v3213 = vunpack.c.l.b16 %v3078
    %v3214 = vunpack.c.l.b16 %v3079
    %v3215 = vunpack.c.l.b16 %v3080
    %v3216 = vunpack.c.l.b16 %v3081
    %v3217 = vunpack.c.l.b16 %v3082
    %v3218 = vunpack.c.l.b16 %v3083
    %v3219 = vunpack.c.l.b16 %v3084
    %v3220 = vunpack.c.l.b16 %v3085
    %v3221 = vunpack.c.l.b16 %v3086
    %v3222 = vunpack.c.l.b16 %v3087
    %v3223 = vunpack.c.l.b16 %v3088
    %v3224 = vunpack.c.l.b16 %v3089
    %v3225 = vunpack.c.l.b16 %v3090
    %v3226 = vunpack.c.l.b16 %v3091
    %v3227 = vunpack.c.l.b16 %v3092
    %v3228 = vunpack.c.l.b16 %v3093
    %v3229 = vunpack.c.l.b16 %v3094
    %v3230 = vunpack.c.l.b16 %v3095
    %v3231 = vpack.c.b16 %v3168, %v3167
    %v3232 = vpack.c.b16 %v3170, %v3169
    %v3233 = vpack.c.b16 %v3172, %v3171
    %v3234 = vpack.c.b16 %v3174, %v3173
    %v3235 = vpack.c.b16 %v3176, %v3175
    %v3236 = vpack.c.b16 %v3178, %v3177
    %v3237 = vpack.c.b16 %v3180, %v3179
    %v3238 = vpack.c.b16 %v3182, %v3181
    %v3239 = vpack.c.b16 %v3184, %v3183
    %v3240 = vpack.c.b16 %v3186, %v3185
    %v3241 = vpack.c.b16 %v3188, %v3187
    %v3242 = vpack.c.b16 %v3190, %v3189
    %v3243 = vpack.c.b16 %v3192, %v3191
    %v3244 = vpack.c.b16 %v3194, %v3193
    %v3245 = vpack.c.b16 %v3196, %v3195
    %v3246 = vpack.c.b16 %v3198, %v3197
    %v3247 = vpack.c.b16 %v3200, %v3199
    %v3248 = vpack.c.b16 %v3202, %v3201
    %v3249 = vpack.c.b16 %v3204, %v3203
    %v3250 = vpack.c.b16 %v3206, %v3205
    %v3251 = vpack.c.b16 %v3208, %v3207
    %v3252 = vpack.c.b16 %v3210, %v3209
    %v3253 = vpack.c.b16 %v3212, %v3211
    %v3254 = vpack.c.b16 %v3214, %v3213
    %v3255 = vpack.c.b16 %v3216, %v3215
    %v3256 = vpack.c.b16 %v3218, %v3217
    %v3257 = vpack.c.b16 %v3220, %v3219
    %v3258 = vpack.c.b16 %v3222, %v3221
    %v3259 = vpack.c.b16 %v3224, %v3223
    %v3260 = vpack.c.b16 %v3226, %v3225
    %v3261 = vpack.c.b16 %v3228, %v3227
    %v3262 = vpack.c.b16 %v3230, %v3229
    %3295 = vmatprep.subr.bf16.mxu0 0
    %3296 = vmatpush1.bf16.msra.mxu0 %v3231
    %3297 = vmatprep.subr.bf16.mxu0 0
    %3298 = vmatpush1.bf16.msra.mxu0 %v3232
    %3299 = vmatprep.subr.bf16.mxu0 0
    %3300 = vmatpush1.bf16.msra.mxu0 %v3233
    %3301 = vmatprep.subr.bf16.mxu0 0
    %3302 = vmatpush1.bf16.msra.mxu0 %v3234
    %3303 = vmatprep.subr.bf16.mxu0 0
    %3304 = vmatpush1.bf16.msra.mxu0 %v3235
    %3305 = vmatprep.subr.bf16.mxu0 0
    %3306 = vmatpush1.bf16.msra.mxu0 %v3236
    %3307 = vmatprep.subr.bf16.mxu0 0
    %3308 = vmatpush1.bf16.msra.mxu0 %v3237
    %3309 = vmatprep.subr.bf16.mxu0 0
    %3310 = vmatpush1.bf16.msra.mxu0 %v3238
    %3311 = vmatprep.subr.bf16.mxu0 0
    %3312 = vmatpush1.bf16.msra.mxu0 %v3239
    %3313 = vmatprep.subr.bf16.mxu0 0
    %3314 = vmatpush1.bf16.msra.mxu0 %v3240
    %3315 = vmatprep.subr.bf16.mxu0 0
    %3316 = vmatpush1.bf16.msra.mxu0 %v3241
    %3317 = vmatprep.subr.bf16.mxu0 0
    %3318 = vmatpush1.bf16.msra.mxu0 %v3242
    %3319 = vmatprep.subr.bf16.mxu0 0
    %3320 = vmatpush1.bf16.msra.mxu0 %v3243
    %3321 = vmatprep.subr.bf16.mxu0 0
    %3322 = vmatpush1.bf16.msra.mxu0 %v3244
    %3323 = vmatprep.subr.bf16.mxu0 0
    %3324 = vmatpush1.bf16.msra.mxu0 %v3245
    %3325 = vmatprep.subr.bf16.mxu0 0
    %3326 = vmatpush1.bf16.msra.mxu0 %v3246
    %3327 = vmatprep.mubr.bf16.mxu0 %v3029
    %3328 = vmatmul.mubr.bf16.gmra.mrb[0].mxu0 %v3028
    %v3329 = vpop.f32.mrb[0].mxu0
    %v3330 = vadd.f32 %v3101, %v3329
    %v3331 = vpop.f32.mrb[0].mxu0
    %v3332 = vpop.f32.mrb[0].mxu0
    %v3333 = vpop.f32.mrb[0].mxu0
    %3334 = vdwg.mxu0
    %3335 = vmatprep.subr.bf16.mxu0 0
    %3336 = vmatpush1.bf16.msra.mxu0 %v3247
    %3337 = vmatprep.subr.bf16.mxu0 0
    %3338 = vmatpush1.bf16.msra.mxu0 %v3248
    %3339 = vmatprep.subr.bf16.mxu0 0
    %3340 = vmatpush1.bf16.msra.mxu0 %v3249
    %3341 = vmatprep.subr.bf16.mxu0 0
    %3342 = vmatpush1.bf16.msra.mxu0 %v3250
    %3343 = vmatprep.subr.bf16.mxu0 0
    %3344 = vmatpush1.bf16.msra.mxu0 %v3251
    %3345 = vmatprep.subr.bf16.mxu0 0
    %3346 = vmatpush1.bf16.msra.mxu0 %v3252
    %3347 = vmatprep.subr.bf16.mxu0 0
    %3348 = vmatpush1.bf16.msra.mxu0 %v3253
    %3349 = vmatprep.subr.bf16.mxu0 0
    %3350 = vmatpush1.bf16.msra.mxu0 %v3254
    %3351 = vmatprep.subr.bf16.mxu0 0
    %3352 = vmatpush1.bf16.msra.mxu0 %v3255
    %3353 = vmatprep.subr.bf16.mxu0 0
    %3354 = vmatpush1.bf16.msra.mxu0 %v3256
    %3355 = vmatprep.subr.bf16.mxu0 0
    %3356 = vmatpush1.bf16.msra.mxu0 %v3257
    %3357 = vmatprep.subr.bf16.mxu0 0
    %3358 = vmatpush1.bf16.msra.mxu0 %v3258
    %3359 = vmatprep.subr.bf16.mxu0 0
    %3360 = vmatpush1.bf16.msra.mxu0 %v3259
    %3361 = vmatprep.subr.bf16.mxu0 0
    %3362 = vmatpush1.bf16.msra.mxu0 %v3260
    %3363 = vmatprep.subr.bf16.mxu0 0
    %3364 = vmatpush1.bf16.msra.mxu0 %v3261
    %3365 = vmatprep.subr.bf16.mxu0 0
    %3366 = vmatpush1.bf16.msra.mxu0 %v3262
    %3367 = vmatprep.mubr.bf16.mxu0 %v3031
    %3368 = vmatmul.mubr.bf16.gmra.mrb[0].mxu0 %v3030
    %v3369 = vpop.f32.mrb[0].mxu0
    %v3370 = vadd.f32 %v3330, %v3369
    %v3371 = vpop.f32.mrb[0].mxu0
    %v3372 = vpop.f32.mrb[0].mxu0
    %v3373 = vpop.f32.mrb[0].mxu0
    %3374 = vdwg.mxu0
    %v3375 = vpack.c.bf16 %v3370, %v3370
    %3376 = vst [vmem:[#allocation11] sm:$0x1] %v3375
    // Predicated region
    $region50: #{tpu_custom_call.1} parent=1 // pred_check
      _
    $region51: #{tpu_custom_call.1} parent=1 // pred_check_branch
      %3378 = sbr.rel (0) target = $region53
    $region52: #{tpu_custom_call.1} parent=1 // pred_region
      %s3380 = ssub.s32 16, 16
      %3381 = vsyncadd [#allocation4], %s3380
      %s3383 = sshll.u32 [#allocation11], 4
      %s3384 = int_to_ptr.vmem [resolvable:$true] %s3383
      %3386 = dma.vmem_to_hbm [thread:$0]  %s3384, 16, %s7, [#allocation4]
    $region53: #{tpu_custom_call.1} parent=1 // pred_fallthru
      _
    // Predicated region
    $region54: #{tpu_custom_call.1} parent=1 // pred_check
      _
    $region55: #{tpu_custom_call.1} parent=1 // pred_check_branch
      %3388 = sbr.rel (0) target = $region57
    $region56: #{tpu_custom_call.1} parent=1 // pred_region
      %3389 = dma.done [#allocation4], 16
    $region57: #{tpu_custom_call.1} parent=1 // pred_fallthru
      _
    %3390 = vsyncpa [#allocation3], 1
    %3391 = vsyncpa [#allocation6], 1
    %3392 = vsyncpa [#allocation9], 1
    %3393 = vsyncpa [#allocation4], 1

</llo_original>
